<compile_context>
chip_gen: v5e
topology: v5e:2x2
jax: 0.10.0
libtpu: 0.0.40
codegen_flags: <defaults>
</compile_context>

<pallas_src>
import functools
import math

import jax
import jax.numpy as jnp
from jax.experimental import pallas as pl
from jax.experimental.pallas import tpu as pltpu


def _mha_kernel(x_ref, wq_ref, wk_ref, wv_ref, wo_ref, bo_ref, o_ref,
                k_scratch, v_scratch, m_sc, l_sc, acc_sc, *,
                num_heads, head_dim, q_tile, kv_tile, num_kv_tiles):
    # x_ref:     (1, T_pad, d_in)     full (padded) sequence, current batch elem
    # wq/wk/wv:  (d_in, d_out)        pre-transposed [in, out], no bias
    # wo_ref:    (H, head_dim, d_out) out_proj weight, head-split
    # bo_ref:    (1, d_out)
    # o_ref:     (1, q_tile, d_out)
    # k_scratch: (num_kv_tiles, H, head_dim, kv_tile)   model dtype
    # v_scratch: (num_kv_tiles, H, kv_tile, head_dim)   model dtype
    # m_sc/l_sc: (H, q_tile, 1) f32; acc_sc: (H, q_tile, head_dim) f32
    mxu_dtype = x_ref.dtype               # bf16 models feed bf16 to the MXU
    j = pl.program_id(1)

    # ---- K/V projection: once per batch element (j axis is sequential). ----
    # Transposes for the head split happen here, off the per-q-tile critical
    # path.  K is built directly as (H, head_dim, kv_tile) so the score matmul
    # needs no further transpose.
    @pl.when(j == 0)
    def _project_kv():
        for kv in range(num_kv_tiles):                      # static unroll
            x_blk = x_ref[0, pl.ds(kv * kv_tile, kv_tile), :]        # (kt, d_in)
            k_blk = jnp.dot(x_blk, wk_ref[...],
                            preferred_element_type=jnp.float32)      # (kt, d_out)
            v_blk = jnp.dot(x_blk, wv_ref[...],
                            preferred_element_type=jnp.float32)      # (kt, d_out)
            k_scratch[kv] = k_blk.T.reshape(
                num_heads, head_dim, kv_tile).astype(mxu_dtype)      # (H, hd, kt)
            v_scratch[kv] = jnp.swapaxes(
                v_blk.T.reshape(num_heads, head_dim, kv_tile),
                1, 2).astype(mxu_dtype)                              # (H, kt, hd)

    # ---- Q projection for this query tile; 1/sqrt(head_dim) folded in. ----
    scale = 1.0 / math.sqrt(head_dim)
    q_start = pl.multiple_of(j * q_tile, q_tile)
    x_q = x_ref[0, pl.ds(q_start, q_tile), :]                        # (tq, d_in)
    q = jnp.dot(x_q, wq_ref[...], preferred_element_type=jnp.float32) * scale
    qh = jnp.swapaxes(q.T.reshape(num_heads, head_dim, q_tile),
                      1, 2).astype(mxu_dtype)                        # (H, tq, hd)

    # ---- Flash-style online softmax over causally needed KV tiles only. ----
    m_sc[...] = jnp.full(m_sc.shape, -1e30, dtype=m_sc.dtype)
    l_sc[...] = jnp.zeros(l_sc.shape, dtype=l_sc.dtype)
    acc_sc[...] = jnp.zeros(acc_sc.shape, dtype=acc_sc.dtype)

    num_live_kv = (j + 1) if num_kv_tiles > 1 else 1   # causal clip of KV extent

    @pl.loop(0, num_live_kv)
    def _kv_step(kv_idx):
        k_blk = k_scratch[kv_idx]                                    # (H, hd, kt)
        v_blk = v_scratch[kv_idx]                                    # (H, kt, hd)
        s = jnp.einsum('hqd,hdk->hqk', qh, k_blk,
                       preferred_element_type=jnp.float32)           # (H, tq, kt)
        # Causal mask on global indices (large finite negative, not -inf).
        kv_start = kv_idx * kv_tile
        row = q_start + jax.lax.broadcasted_iota(jnp.int32, (q_tile, kv_tile), 0)
        col = kv_start + jax.lax.broadcasted_iota(jnp.int32, (q_tile, kv_tile), 1)
        s = jnp.where((col > row)[None, :, :], jnp.float32(-1e30), s)

        m_prev = m_sc[...]
        m_new = jnp.maximum(m_prev, jnp.max(s, axis=-1, keepdims=True))
        alpha = jnp.exp(m_prev - m_new)
        p = jnp.exp(s - m_new)
        l_sc[...] = alpha * l_sc[...] + jnp.sum(p, axis=-1, keepdims=True)
        acc_sc[...] = alpha * acc_sc[...] + jnp.einsum(
            'hqk,hkd->hqd', p.astype(mxu_dtype), v_blk,
            preferred_element_type=jnp.float32)                      # (H, tq, hd)
        m_sc[...] = m_new

    # dropout p = 0.0 -> identity (skipped)
    ctx = acc_sc[...] * pl.reciprocal(l_sc[...], approx=True)        # (H, tq, hd)

    # ---- Output projection with the head merge fused in (no merge transpose).
    out = jnp.einsum('hqd,hde->hqe', ctx.astype(mxu_dtype), wo_ref[...],
                     preferred_element_type=jnp.float32)             # (H, tq, d_out)
    out = jnp.sum(out, axis=0) + bo_ref[...]                         # (tq, d_out)
    # Note: d_out < 128 means lane-masked stores; for real deployments keep
    # d_out (or a fused output slab) lane-dense.
    o_ref[0] = out.astype(o_ref.dtype)


def _vmem_capacity_bytes():
    try:
        info = pltpu.get_tpu_info()
        return int(getattr(info, "vmem_capacity_bytes", 64 * 1024 * 1024))
    except Exception:
        return 64 * 1024 * 1024


def multi_head_attention(x, wq, wk, wv, wo, bo, *, num_heads):
    """x: [b, T, d_in]; wq/wk/wv: [d_in, d_out]; wo: [d_out, d_out]; bo: [d_out]."""
    b, T, d_in = x.shape
    d_out = wq.shape[1]
    assert d_out % num_heads == 0
    head_dim = d_out // num_heads

    vmem_cap = _vmem_capacity_bytes()

    # Generation-aware tile size.  With the causal KV loop the per-step score
    # tile is only (H, q_tile, kv_tile); the dominant VMEM use is the per-batch
    # K/V scratch (2 * T_pad * d_out elements).
    # TODO(synk): for very long sequences, move the K/V projection into a
    # separate pallas_call and stream K/V per kv-tile via BlockSpecs instead of
    # holding the full-sequence scratch (and per-q-tile x) in VMEM.
    if T <= 256:
        q_tile = T                       # single tile; block dims == full dims
    else:
        # 512 on 128-MiB parts (v6e; on v5e the single f32 EUP may prefer 256),
        # 256 on v7x's 64-MiB VMEM.
        q_tile = 512 if vmem_cap >= 100 * 1024 * 1024 else 256
    T_pad = -(-T // q_tile) * q_tile     # pad instead of the old q_tile=T fallback
    kv_tile = q_tile
    num_kv_tiles = T_pad // kv_tile
    num_q_tiles = T_pad // q_tile

    if T_pad != T:
        # Padded keys land strictly above the causal diagonal for every real
        # query row, so padding is masked out; padded query rows are sliced off.
        x = jnp.pad(x, ((0, 0), (0, T_pad - T), (0, 0)))

    # Head-split out_proj so the head merge fuses into the final matmul.
    wo_h = wo.reshape(num_heads, head_dim, d_out)
    bo2 = bo.reshape(1, d_out)

    kernel = functools.partial(
        _mha_kernel, num_heads=num_heads, head_dim=head_dim,
        q_tile=q_tile, kv_tile=kv_tile, num_kv_tiles=num_kv_tiles)

    itemsize = x.dtype.itemsize
    proj_flops = 2 * b * T_pad * d_in * 3 * d_out + 2 * b * T_pad * d_out * d_out
    attn_flops = 2 * b * d_out * T_pad * T_pad       # QK^T + PV, causal ~halved
    cost = pl.CostEstimate(
        flops=int(proj_flops + attn_flops),
        transcendentals=int(b * num_heads * T_pad * T_pad // 2),
        bytes_accessed=int(x.size * itemsize
                           + (wq.size + wk.size + wv.size + wo.size + bo.size) * 4
                           + b * T_pad * d_out * itemsize))

    # ~25% headroom below physical VMEM (96 MiB on 128-MiB parts, 48 MiB on v7x).
    vmem_limit = min(int(vmem_cap * 3 // 4), 100 * 1024 * 1024)

    def build(single_buffer_weights):
        def wspec(shape):
            index_map = lambda i, j, _shape=shape: (0,) * len(_shape)
            if single_buffer_weights:
                # Constant block index -> double buffering is pure VMEM waste.
                return pl.BlockSpec(shape, index_map, pipeline_mode=pl.Buffered(1))
            return pl.BlockSpec(shape, index_map)

        return pl.pallas_call(
            kernel,
            out_shape=jax.ShapeDtypeStruct((b, T_pad, d_out), x.dtype),
            grid_spec=pltpu.PrefetchScalarGridSpec(
                num_scalar_prefetch=0,
                grid=(b, num_q_tiles),
                in_specs=[
                    # Full (padded) sequence resident per batch element: it is
                    # needed once (at j == 0) for the hoisted K/V projection,
                    # then only q-tile rows are read per step.
                    pl.BlockSpec((1, T_pad, d_in), lambda i, j: (i, 0, 0)),
                    wspec((d_in, d_out)),                 # wq
                    wspec((d_in, d_out)),                 # wk
                    wspec((d_in, d_out)),                 # wv
                    wspec((num_heads, head_dim, d_out)),  # wo (head-split)
                    wspec((1, d_out)),                    # bo
                ],
                out_specs=pl.BlockSpec((1, q_tile, d_out), lambda i, j: (i, j, 0)),
                scratch_shapes=[
                    pltpu.VMEM((num_kv_tiles, num_heads, head_dim, kv_tile), x.dtype),
                    pltpu.VMEM((num_kv_tiles, num_heads, kv_tile, head_dim), x.dtype),
                    pltpu.VMEM((num_heads, q_tile, 1), jnp.float32),
                    pltpu.VMEM((num_heads, q_tile, 1), jnp.float32),
                    pltpu.VMEM((num_heads, q_tile, head_dim), jnp.float32),
                ],
            ),
            compiler_params=pltpu.CompilerParams(
                # Batch is parallel (megacore split); the q-tile axis must stay
                # sequential so the per-batch K/V scratch remains valid.
                dimension_semantics=("parallel", "arbitrary"),
                vmem_limit_bytes=vmem_limit,
            ),
            cost_estimate=cost,
        )

    try:
        out = build(single_buffer_weights=True)(x, wq, wk, wv, wo_h, bo2)
    except Exception:
        # Fallback for JAX versions that reject pl.Buffered(1) single-buffering.
        out = build(single_buffer_weights=False)(x, wq, wk, wv, wo_h, bo2)

    return out[:, :T, :] if T_pad != T else out


def _reference(x, wq, wk, wv, wo, bo, *, num_heads):
    """Pure-JAX reference mirroring the PyTorch forward."""
    b, T, d_in = x.shape
    d_out = wq.shape[1]
    head_dim = d_out // num_heads
    q = x @ wq
    k = x @ wk
    v = x @ wv
    q = q.reshape(b, T, num_heads, head_dim).transpose(0, 2, 1, 3)
    k = k.reshape(b, T, num_heads, head_dim).transpose(0, 2, 1, 3)
    v = v.reshape(b, T, num_heads, head_dim).transpose(0, 2, 1, 3)
    scores = q @ jnp.swapaxes(k, -1, -2)
    mask = jnp.triu(jnp.ones((T, T), bool), k=1)
    scores = jnp.where(mask, -jnp.inf, scores)
    attn = jax.nn.softmax(scores / math.sqrt(head_dim), axis=-1)
    ctx = (attn @ v).transpose(0, 2, 1, 3).reshape(b, T, d_out)
    return ctx @ wo + bo


if __name__ == "__main__":
    # Shapes from the reference usage: batch=2, num_tokens=6, d_in=3,
    # d_out=2, num_heads=2, dropout=0.0
    d_in, d_out, num_heads = 3, 2, 2

    inputs = jnp.array(
        [[0.43, 0.15, 0.89],
         [0.55, 0.87, 0.66],
         [0.57, 0.85, 0.64],
         [0.22, 0.58, 0.33],
         [0.77, 0.25, 0.10],
         [0.05, 0.80, 0.55]], dtype=jnp.float32)
    x = jnp.stack([inputs, inputs], axis=0)          # (2, 6, 3)

    # Deterministic parameter init (uniform, mimicking nn.Linear default range).
    key = jax.random.PRNGKey(0)
    kq, kk, kv, kw, kb = jax.random.split(key, 5)
    lim_in = 1.0 / math.sqrt(d_in)
    lim_out = 1.0 / math.sqrt(d_out)
    wq = jax.random.uniform(kq, (d_in, d_out), jnp.float32, -lim_in, lim_in)
    wk = jax.random.uniform(kk, (d_in, d_out), jnp.float32, -lim_in, lim_in)
    wv = jax.random.uniform(kv, (d_in, d_out), jnp.float32, -lim_in, lim_in)
    wo = jax.random.uniform(kw, (d_out, d_out), jnp.float32, -lim_out, lim_out)
    bo = jax.random.uniform(kb, (d_out,), jnp.float32, -lim_out, lim_out)

    out = multi_head_attention(x, wq, wk, wv, wo, bo, num_heads=num_heads)
    out = jax.block_until_ready(out)

    ref = _reference(x, wq, wk, wv, wo, bo, num_heads=num_heads)
    assert out.shape == (2, 6, d_out)
    # Tolerance loosened slightly because the softmax normalization uses the
    # hardware approximate reciprocal (EUP path).
    assert jnp.allclose(out, ref, atol=2e-3, rtol=2e-3), (out, ref)

    print("KERNEL_OK")
</pallas_src>

<mosaic_0001>
module attributes {stable_mosaic.version = 11 : i64} {
  func.func @_mha_kernel(%arg0: i32, %arg1: i32, %arg2: memref<1x6x3xf32, #tpu.memory_space<vmem>>, %arg3: memref<3x2xf32, #tpu.memory_space<vmem>>, %arg4: memref<3x2xf32, #tpu.memory_space<vmem>>, %arg5: memref<3x2xf32, #tpu.memory_space<vmem>>, %arg6: memref<2x1x2xf32, #tpu.memory_space<vmem>>, %arg7: memref<1x2xf32, #tpu.memory_space<vmem>>, %arg8: memref<1x6x2xf32, #tpu.memory_space<vmem>>, %arg9: memref<1x2x1x6xf32, #tpu.memory_space<vmem>>, %arg10: memref<1x2x6x1xf32, #tpu.memory_space<vmem>>, %arg11: memref<2x6x1xf32, #tpu.memory_space<vmem>>, %arg12: memref<2x6x1xf32, #tpu.memory_space<vmem>>, %arg13: memref<2x6x1xf32, #tpu.memory_space<vmem>>) attributes {dimension_semantics = [#tpu.dimension_semantics<parallel>, #tpu.dimension_semantics<arbitrary>], iteration_bounds = array<i64: 2, 1>, scalar_prefetch = 0 : i64, scratch_operands = 5 : i64, tpu.core_type = #tpu.core_type<tc>, window_params = [{transform_indices = @transform_0, window_bounds = array<i64: 1, 6, 3>}, {pipeline_mode = #tpu.pipeline_mode<synchronous>, transform_indices = @transform_1, window_bounds = array<i64: 3, 2>}, {pipeline_mode = #tpu.pipeline_mode<synchronous>, transform_indices = @transform_2, window_bounds = array<i64: 3, 2>}, {pipeline_mode = #tpu.pipeline_mode<synchronous>, transform_indices = @transform_3, window_bounds = array<i64: 3, 2>}, {pipeline_mode = #tpu.pipeline_mode<synchronous>, transform_indices = @transform_4, window_bounds = array<i64: 2, 1, 2>}, {pipeline_mode = #tpu.pipeline_mode<synchronous>, transform_indices = @transform_5, window_bounds = array<i64: 1, 2>}, {transform_indices = @transform_6, window_bounds = array<i64: 1, 6, 2>}]} {
    %c0_i32 = arith.constant 0 : i32
    %0 = arith.cmpi eq, %arg1, %c0_i32 : i32
    %1 = arith.extui %0 : i1 to i32
    %c0_i32_0 = arith.constant 0 : i32
    %2 = arith.cmpi ne, %1, %c0_i32_0 : i32
    scf.if %2 {
      %c0_66 = arith.constant 0 : index
      %c0_67 = arith.constant 0 : index
      %c0_68 = arith.constant 0 : index
      %77 = vector.load %arg2[%c0_66, %c0_67, %c0_68] : memref<1x6x3xf32, #tpu.memory_space<vmem>>, vector<1x6x3xf32>
      %78 = vector.shape_cast %77 : vector<1x6x3xf32> to vector<6x3xf32>
      %c0_69 = arith.constant 0 : index
      %c0_70 = arith.constant 0 : index
      %79 = vector.load %arg4[%c0_69, %c0_70] : memref<3x2xf32, #tpu.memory_space<vmem>>, vector<3x2xf32>
      %cst_71 = arith.constant dense<0.000000e+00> : vector<6x2xf32>
      %80 = tpu.matmul %78, %79, %cst_71 {dimension_numbers = #tpu.dot_dimension_numbers<[1], [0], [0], [1], [0, 0, 1, 1], [], []>} : vector<6x3xf32>, vector<3x2xf32>, vector<6x2xf32> -> vector<6x2xf32>
      %c0_72 = arith.constant 0 : index
      %c0_73 = arith.constant 0 : index
      %81 = vector.load %arg5[%c0_72, %c0_73] : memref<3x2xf32, #tpu.memory_space<vmem>>, vector<3x2xf32>
      %cst_74 = arith.constant dense<0.000000e+00> : vector<6x2xf32>
      %82 = tpu.matmul %78, %81, %cst_74 {dimension_numbers = #tpu.dot_dimension_numbers<[1], [0], [0], [1], [0, 0, 1, 1], [], []>} : vector<6x3xf32>, vector<3x2xf32>, vector<6x2xf32> -> vector<6x2xf32>
      %83 = tpu.transpose %80, [1, 0] : vector<6x2xf32> -> vector<2x6xf32>
      %84 = vector.shape_cast %83 : vector<2x6xf32> to vector<2x1x6xf32>
      %c0_75 = arith.constant 0 : index
      %c0_76 = arith.constant 0 : index
      %c0_77 = arith.constant 0 : index
      %c0_78 = arith.constant 0 : index
      %85 = vector.load %arg9[%c0_75, %c0_76, %c0_77, %c0_78] : memref<1x2x1x6xf32, #tpu.memory_space<vmem>>, vector<1x2x1x6xf32>
      %86 = vector.shape_cast %85 : vector<1x2x1x6xf32> to vector<2x1x6xf32>
      %87 = vector.shape_cast %84 : vector<2x1x6xf32> to vector<1x2x1x6xf32>
      tpu.vector_store %arg9[%c0_75, %c0_76, %c0_77, %c0_78], %87 {strides = array<i32>} : memref<1x2x1x6xf32, #tpu.memory_space<vmem>>, vector<1x2x1x6xf32>,
      %88 = tpu.transpose %82, [1, 0] : vector<6x2xf32> -> vector<2x6xf32>
      %89 = vector.shape_cast %88 : vector<2x6xf32> to vector<2x1x6xf32>
      %90 = tpu.transpose %89, [0, 2, 1] : vector<2x1x6xf32> -> vector<2x6x1xf32>
      %c0_79 = arith.constant 0 : index
      %c0_80 = arith.constant 0 : index
      %c0_81 = arith.constant 0 : index
      %c0_82 = arith.constant 0 : index
      %91 = vector.load %arg10[%c0_79, %c0_80, %c0_81, %c0_82] : memref<1x2x6x1xf32, #tpu.memory_space<vmem>>, vector<1x2x6x1xf32>
      %92 = vector.shape_cast %91 : vector<1x2x6x1xf32> to vector<2x6x1xf32>
      %93 = vector.shape_cast %90 : vector<2x6x1xf32> to vector<1x2x6x1xf32>
      tpu.vector_store %arg10[%c0_79, %c0_80, %c0_81, %c0_82], %93 {strides = array<i32>} : memref<1x2x6x1xf32, #tpu.memory_space<vmem>>, vector<1x2x6x1xf32>,
    } else {
    }
    %c6_i32 = arith.constant 6 : i32
    %3 = arith.muli %arg1, %c6_i32 : i32
    %4 = tpu.assume_multiple %3, 6 : i32
    %c0 = arith.constant 0 : index
    %5 = arith.index_cast %4 : i32 to index
    %c0_1 = arith.constant 0 : index
    %6 = vector.load %arg2[%c0, %5, %c0_1] : memref<1x6x3xf32, #tpu.memory_space<vmem>>, vector<1x6x3xf32>
    %7 = vector.shape_cast %6 : vector<1x6x3xf32> to vector<6x3xf32>
    %c0_2 = arith.constant 0 : index
    %c0_3 = arith.constant 0 : index
    %8 = vector.load %arg3[%c0_2, %c0_3] : memref<3x2xf32, #tpu.memory_space<vmem>>, vector<3x2xf32>
    %cst = arith.constant dense<0.000000e+00> : vector<6x2xf32>
    %9 = tpu.matmul %7, %8, %cst {dimension_numbers = #tpu.dot_dimension_numbers<[1], [0], [0], [1], [0, 0, 1, 1], [], []>} : vector<6x3xf32>, vector<3x2xf32>, vector<6x2xf32> -> vector<6x2xf32>
    %cst_4 = arith.constant 1.000000e+00 : f32
    %10 = vector.broadcast %cst_4 : f32 to vector<6x2xf32>
    %11 = arith.mulf %9, %10 : vector<6x2xf32>
    %12 = tpu.transpose %11, [1, 0] : vector<6x2xf32> -> vector<2x6xf32>
    %13 = vector.shape_cast %12 : vector<2x6xf32> to vector<2x1x6xf32>
    %14 = tpu.transpose %13, [0, 2, 1] : vector<2x1x6xf32> -> vector<2x6x1xf32>
    %cst_5 = arith.constant -1.000000e+30 : f32
    %15 = vector.broadcast %cst_5 : f32 to vector<2x6x1xf32>
    %c0_6 = arith.constant 0 : index
    %c0_7 = arith.constant 0 : index
    %c0_8 = arith.constant 0 : index
    %16 = vector.load %arg11[%c0_6, %c0_7, %c0_8] : memref<2x6x1xf32, #tpu.memory_space<vmem>>, vector<2x6x1xf32>
    tpu.vector_store %arg11[%c0_6, %c0_7, %c0_8], %15 {strides = array<i32>} : memref<2x6x1xf32, #tpu.memory_space<vmem>>, vector<2x6x1xf32>,
    %cst_9 = arith.constant 0.000000e+00 : f32
    %17 = vector.broadcast %cst_9 : f32 to vector<2x6x1xf32>
    %c0_10 = arith.constant 0 : index
    %c0_11 = arith.constant 0 : index
    %c0_12 = arith.constant 0 : index
    %18 = vector.load %arg12[%c0_10, %c0_11, %c0_12] : memref<2x6x1xf32, #tpu.memory_space<vmem>>, vector<2x6x1xf32>
    tpu.vector_store %arg12[%c0_10, %c0_11, %c0_12], %17 {strides = array<i32>} : memref<2x6x1xf32, #tpu.memory_space<vmem>>, vector<2x6x1xf32>,
    %cst_13 = arith.constant 0.000000e+00 : f32
    %19 = vector.broadcast %cst_13 : f32 to vector<2x6x1xf32>
    %c0_14 = arith.constant 0 : index
    %c0_15 = arith.constant 0 : index
    %c0_16 = arith.constant 0 : index
    %20 = vector.load %arg13[%c0_14, %c0_15, %c0_16] : memref<2x6x1xf32, #tpu.memory_space<vmem>>, vector<2x6x1xf32>
    tpu.vector_store %arg13[%c0_14, %c0_15, %c0_16], %19 {strides = array<i32>} : memref<2x6x1xf32, #tpu.memory_space<vmem>>, vector<2x6x1xf32>,
    %c0_i32_17 = arith.constant 0 : i32
    %c1_i32 = arith.constant 1 : i32
    %21 = arith.muli %c0_i32_17, %c1_i32 : i32
    %c0_i32_18 = arith.constant 0 : i32
    %22 = arith.addi %c0_i32_18, %21 : i32
    %23 = arith.index_cast %22 : i32 to index
    %c0_19 = arith.constant 0 : index
    %c0_20 = arith.constant 0 : index
    %c0_21 = arith.constant 0 : index
    %24 = vector.load %arg9[%23, %c0_19, %c0_20, %c0_21] : memref<1x2x1x6xf32, #tpu.memory_space<vmem>>, vector<1x2x1x6xf32>
    %25 = vector.shape_cast %24 : vector<1x2x1x6xf32> to vector<2x1x6xf32>
    %26 = arith.index_cast %22 : i32 to index
    %c0_22 = arith.constant 0 : index
    %c0_23 = arith.constant 0 : index
    %c0_24 = arith.constant 0 : index
    %27 = vector.load %arg10[%26, %c0_22, %c0_23, %c0_24] : memref<1x2x6x1xf32, #tpu.memory_space<vmem>>, vector<1x2x6x1xf32>
    %28 = vector.shape_cast %27 : vector<1x2x6x1xf32> to vector<2x6x1xf32>
    "tpu.trace_start"() <{level = 10 : i32, message = "hqd,hdk->hqk"}> : () -> ()
    %cst_25 = arith.constant dense<0.000000e+00> : vector<2x6x6xf32>
    %29 = tpu.matmul %14, %25, %cst_25 {dimension_numbers = #tpu.dot_dimension_numbers<[2], [1], [1], [2], [0, 0, 0, 1, 1, 2], [0], [0]>} : vector<2x6x1xf32>, vector<2x1x6xf32>, vector<2x6x6xf32> -> vector<2x6x6xf32>
    "tpu.trace_stop"() : () -> ()
    %c6_i32_26 = arith.constant 6 : i32
    %30 = arith.muli %22, %c6_i32_26 : i32
    %31 = tpu.iota {dimensions = array<i32: 0>} : vector<6x6xi32>
    %32 = vector.broadcast %4 : i32 to vector<6x6xi32>
    %33 = arith.addi %32, %31 : vector<6x6xi32>
    %34 = tpu.iota {dimensions = array<i32: 1>} : vector<6x6xi32>
    %35 = vector.broadcast %30 : i32 to vector<6x6xi32>
    %36 = arith.addi %35, %34 : vector<6x6xi32>
    %37 = arith.cmpi sgt, %36, %33 : vector<6x6xi32>
    %38 = vector.shape_cast %37 : vector<6x6xi1> to vector<1x6x6xi1>
    %cst_27 = arith.constant -1.000000e+30 : f32
    %39 = vector.shape_cast %38 : vector<1x6x6xi1> to vector<1x6x6xi1>
    %40 = vector.broadcast %39 : vector<1x6x6xi1> to vector<2x6x6xi1>
    %41 = vector.broadcast %cst_27 : f32 to vector<2x6x6xf32>
    %42 = arith.select %40, %41, %29 : vector<2x6x6xi1>, vector<2x6x6xf32>
    %c0_28 = arith.constant 0 : index
    %c0_29 = arith.constant 0 : index
    %c0_30 = arith.constant 0 : index
    %43 = vector.load %arg11[%c0_28, %c0_29, %c0_30] : memref<2x6x1xf32, #tpu.memory_space<vmem>>, vector<2x6x1xf32>
    %cst_31 = arith.constant dense<0xFF800000> : vector<2x6xf32>
    %44 = vector.multi_reduction <maximumf>, %42, %cst_31 [2] : vector<2x6x6xf32> to vector<2x6xf32>
    %45 = vector.shape_cast %44 : vector<2x6xf32> to vector<2x6x1xf32>
    %46 = arith.maximumf %43, %45 : vector<2x6x1xf32>
    %47 = arith.subf %43, %46 : vector<2x6x1xf32>
    %48 = math.exp %47 : vector<2x6x1xf32>
    %49 = vector.broadcast %46 : vector<2x6x1xf32> to vector<2x6x6xf32>
    %50 = arith.subf %42, %49 : vector<2x6x6xf32>
    %51 = math.exp %50 : vector<2x6x6xf32>
    %c0_32 = arith.constant 0 : index
    %c0_33 = arith.constant 0 : index
    %c0_34 = arith.constant 0 : index
    %52 = vector.load %arg12[%c0_32, %c0_33, %c0_34] : memref<2x6x1xf32, #tpu.memory_space<vmem>>, vector<2x6x1xf32>
    %53 = arith.mulf %48, %52 : vector<2x6x1xf32>
    %cst_35 = arith.constant dense<0.000000e+00> : vector<2x6xf32>
    %54 = vector.multi_reduction <add>, %51, %cst_35 [2] : vector<2x6x6xf32> to vector<2x6xf32>
    %55 = vector.shape_cast %54 : vector<2x6xf32> to vector<2x6x1xf32>
    %56 = arith.addf %53, %55 : vector<2x6x1xf32>
    %c0_36 = arith.constant 0 : index
    %c0_37 = arith.constant 0 : index
    %c0_38 = arith.constant 0 : index
    %57 = vector.load %arg12[%c0_36, %c0_37, %c0_38] : memref<2x6x1xf32, #tpu.memory_space<vmem>>, vector<2x6x1xf32>
    tpu.vector_store %arg12[%c0_36, %c0_37, %c0_38], %56 {strides = array<i32>} : memref<2x6x1xf32, #tpu.memory_space<vmem>>, vector<2x6x1xf32>,
    %c0_39 = arith.constant 0 : index
    %c0_40 = arith.constant 0 : index
    %c0_41 = arith.constant 0 : index
    %58 = vector.load %arg13[%c0_39, %c0_40, %c0_41] : memref<2x6x1xf32, #tpu.memory_space<vmem>>, vector<2x6x1xf32>
    %59 = arith.mulf %48, %58 : vector<2x6x1xf32>
    "tpu.trace_start"() <{level = 10 : i32, message = "hqk,hkd->hqd"}> : () -> ()
    %cst_42 = arith.constant dense<0.000000e+00> : vector<2x6x1xf32>
    %60 = tpu.matmul %51, %28, %cst_42 {dimension_numbers = #tpu.dot_dimension_numbers<[2], [1], [1], [2], [0, 0, 0, 1, 1, 2], [0], [0]>} : vector<2x6x6xf32>, vector<2x6x1xf32>, vector<2x6x1xf32> -> vector<2x6x1xf32>
    "tpu.trace_stop"() : () -> ()
    %61 = arith.addf %59, %60 : vector<2x6x1xf32>
    %c0_43 = arith.constant 0 : index
    %c0_44 = arith.constant 0 : index
    %c0_45 = arith.constant 0 : index
    %62 = vector.load %arg13[%c0_43, %c0_44, %c0_45] : memref<2x6x1xf32, #tpu.memory_space<vmem>>, vector<2x6x1xf32>
    tpu.vector_store %arg13[%c0_43, %c0_44, %c0_45], %61 {strides = array<i32>} : memref<2x6x1xf32, #tpu.memory_space<vmem>>, vector<2x6x1xf32>,
    %c0_46 = arith.constant 0 : index
    %c0_47 = arith.constant 0 : index
    %c0_48 = arith.constant 0 : index
    %63 = vector.load %arg11[%c0_46, %c0_47, %c0_48] : memref<2x6x1xf32, #tpu.memory_space<vmem>>, vector<2x6x1xf32>
    tpu.vector_store %arg11[%c0_46, %c0_47, %c0_48], %46 {strides = array<i32>} : memref<2x6x1xf32, #tpu.memory_space<vmem>>, vector<2x6x1xf32>,
    %c1_i32_49 = arith.constant 1 : i32
    %c0_50 = arith.constant 0 : index
    %c0_51 = arith.constant 0 : index
    %c0_52 = arith.constant 0 : index
    %64 = vector.load %arg13[%c0_50, %c0_51, %c0_52] : memref<2x6x1xf32, #tpu.memory_space<vmem>>, vector<2x6x1xf32>
    %c0_53 = arith.constant 0 : index
    %c0_54 = arith.constant 0 : index
    %c0_55 = arith.constant 0 : index
    %65 = vector.load %arg12[%c0_53, %c0_54, %c0_55] : memref<2x6x1xf32, #tpu.memory_space<vmem>>, vector<2x6x1xf32>
    %66 = tpu.reciprocal %65 {approx = true} : vector<2x6x1xf32> -> vector<2x6x1xf32>
    %67 = arith.mulf %64, %66 : vector<2x6x1xf32>
    %c0_56 = arith.constant 0 : index
    %c0_57 = arith.constant 0 : index
    %c0_58 = arith.constant 0 : index
    %68 = vector.load %arg6[%c0_56, %c0_57, %c0_58] : memref<2x1x2xf32, #tpu.memory_space<vmem>>, vector<2x1x2xf32>
    "tpu.trace_start"() <{level = 10 : i32, message = "hqd,hde->hqe"}> : () -> ()
    %cst_59 = arith.constant dense<0.000000e+00> : vector<2x6x2xf32>
    %69 = tpu.matmul %67, %68, %cst_59 {dimension_numbers = #tpu.dot_dimension_numbers<[2], [1], [1], [2], [0, 0, 0, 1, 1, 2], [0], [0]>} : vector<2x6x1xf32>, vector<2x1x2xf32>, vector<2x6x2xf32> -> vector<2x6x2xf32>
    "tpu.trace_stop"() : () -> ()
    %cst_60 = arith.constant dense<0.000000e+00> : vector<6x2xf32>
    %70 = vector.multi_reduction <add>, %69, %cst_60 [0] : vector<2x6x2xf32> to vector<6x2xf32>
    %c0_61 = arith.constant 0 : index
    %c0_62 = arith.constant 0 : index
    %71 = vector.load %arg7[%c0_61, %c0_62] : memref<1x2xf32, #tpu.memory_space<vmem>>, vector<1x2xf32>
    %72 = vector.broadcast %71 : vector<1x2xf32> to vector<6x2xf32>
    %73 = arith.addf %70, %72 : vector<6x2xf32>
    %c0_63 = arith.constant 0 : index
    %c0_64 = arith.constant 0 : index
    %c0_65 = arith.constant 0 : index
    %74 = vector.load %arg8[%c0_63, %c0_64, %c0_65] : memref<1x6x2xf32, #tpu.memory_space<vmem>>, vector<1x6x2xf32>
    %75 = vector.shape_cast %74 : vector<1x6x2xf32> to vector<6x2xf32>
    %76 = vector.shape_cast %73 : vector<6x2xf32> to vector<1x6x2xf32>
    tpu.vector_store %arg8[%c0_63, %c0_64, %c0_65], %76 {strides = array<i32>} : memref<1x6x2xf32, #tpu.memory_space<vmem>>, vector<1x6x2xf32>,
    return
  }
  func.func @transform_0(%arg0: i32, %arg1: i32) -> (i32, i32, i32) {
    %c0_i32 = arith.constant 0 : i32
    %c0_i32_0 = arith.constant 0 : i32
    %c0_i32_1 = arith.constant 0 : i32
    return %arg0, %c0_i32, %c0_i32_0 : i32, i32, i32
  }
  func.func @transform_1(%arg0: i32, %arg1: i32) -> (i32, i32) {
    %c0_i32 = arith.constant 0 : i32
    %c0_i32_0 = arith.constant 0 : i32
    %c0_i32_1 = arith.constant 0 : i32
    return %c0_i32, %c0_i32_0 : i32, i32
  }
  func.func @transform_2(%arg0: i32, %arg1: i32) -> (i32, i32) {
    %c0_i32 = arith.constant 0 : i32
    %c0_i32_0 = arith.constant 0 : i32
    %c0_i32_1 = arith.constant 0 : i32
    return %c0_i32, %c0_i32_0 : i32, i32
  }
  func.func @transform_3(%arg0: i32, %arg1: i32) -> (i32, i32) {
    %c0_i32 = arith.constant 0 : i32
    %c0_i32_0 = arith.constant 0 : i32
    %c0_i32_1 = arith.constant 0 : i32
    return %c0_i32, %c0_i32_0 : i32, i32
  }
  func.func @transform_4(%arg0: i32, %arg1: i32) -> (i32, i32, i32) {
    %c0_i32 = arith.constant 0 : i32
    %c0_i32_0 = arith.constant 0 : i32
    %c0_i32_1 = arith.constant 0 : i32
    %c0_i32_2 = arith.constant 0 : i32
    return %c0_i32, %c0_i32_0, %c0_i32_1 : i32, i32, i32
  }
  func.func @transform_5(%arg0: i32, %arg1: i32) -> (i32, i32) {
    %c0_i32 = arith.constant 0 : i32
    %c0_i32_0 = arith.constant 0 : i32
    %c0_i32_1 = arith.constant 0 : i32
    return %c0_i32, %c0_i32_0 : i32, i32
  }
  func.func @transform_6(%arg0: i32, %arg1: i32) -> (i32, i32, i32) {
    %c0_i32 = arith.constant 0 : i32
    %c0_i32_0 = arith.constant 0 : i32
    return %arg0, %arg1, %c0_i32 : i32, i32, i32
  }
}

module attributes {stable_mosaic.version = 11 : i64} {
  func.func @_mha_kernel(%arg0: i32, %arg1: i32, %arg2: memref<1x6x3xf32, #tpu.memory_space<vmem>>, %arg3: memref<3x2xf32, #tpu.memory_space<vmem>>, %arg4: memref<3x2xf32, #tpu.memory_space<vmem>>, %arg5: memref<3x2xf32, #tpu.memory_space<vmem>>, %arg6: memref<2x1x2xf32, #tpu.memory_space<vmem>>, %arg7: memref<1x2xf32, #tpu.memory_space<vmem>>, %arg8: memref<1x6x2xf32, #tpu.memory_space<vmem>>, %arg9: memref<1x2x1x6xf32, #tpu.memory_space<vmem>>, %arg10: memref<1x2x6x1xf32, #tpu.memory_space<vmem>>, %arg11: memref<2x6x1xf32, #tpu.memory_space<vmem>>, %arg12: memref<2x6x1xf32, #tpu.memory_space<vmem>>, %arg13: memref<2x6x1xf32, #tpu.memory_space<vmem>>) attributes {dimension_semantics = [#tpu.dimension_semantics<parallel>, #tpu.dimension_semantics<arbitrary>], iteration_bounds = array<i64: 2, 1>, scalar_prefetch = 0 : i64, scratch_operands = 5 : i64, tpu.core_type = #tpu.core_type<tc>, window_params = [{transform_indices = @transform_0, window_bounds = array<i64: 1, 6, 3>}, {pipeline_mode = #tpu.pipeline_mode<synchronous>, transform_indices = @transform_1, window_bounds = array<i64: 3, 2>}, {pipeline_mode = #tpu.pipeline_mode<synchronous>, transform_indices = @transform_2, window_bounds = array<i64: 3, 2>}, {pipeline_mode = #tpu.pipeline_mode<synchronous>, transform_indices = @transform_3, window_bounds = array<i64: 3, 2>}, {pipeline_mode = #tpu.pipeline_mode<synchronous>, transform_indices = @transform_4, window_bounds = array<i64: 2, 1, 2>}, {pipeline_mode = #tpu.pipeline_mode<synchronous>, transform_indices = @transform_5, window_bounds = array<i64: 1, 2>}, {transform_indices = @transform_6, window_bounds = array<i64: 1, 6, 2>}]} {
    %c0_i32 = arith.constant 0 : i32
    %0 = arith.cmpi eq, %arg1, %c0_i32 : i32
    %1 = arith.extui %0 : i1 to i32
    %c0_i32_0 = arith.constant 0 : i32
    %2 = arith.cmpi ne, %1, %c0_i32_0 : i32
    scf.if %2 {
      %c0_66 = arith.constant 0 : index
      %c0_67 = arith.constant 0 : index
      %c0_68 = arith.constant 0 : index
      %77 = vector.load %arg2[%c0_66, %c0_67, %c0_68] : memref<1x6x3xf32, #tpu.memory_space<vmem>>, vector<1x6x3xf32>
      %78 = vector.shape_cast %77 : vector<1x6x3xf32> to vector<6x3xf32>
      %c0_69 = arith.constant 0 : index
      %c0_70 = arith.constant 0 : index
      %79 = vector.load %arg4[%c0_69, %c0_70] : memref<3x2xf32, #tpu.memory_space<vmem>>, vector<3x2xf32>
      %cst_71 = arith.constant dense<0.000000e+00> : vector<6x2xf32>
      %80 = tpu.matmul %78, %79, %cst_71 {dimension_numbers = #tpu.dot_dimension_numbers<[1], [0], [0], [1], [0, 0, 1, 1], [], []>} : vector<6x3xf32>, vector<3x2xf32>, vector<6x2xf32> -> vector<6x2xf32>
      %c0_72 = arith.constant 0 : index
      %c0_73 = arith.constant 0 : index
      %81 = vector.load %arg5[%c0_72, %c0_73] : memref<3x2xf32, #tpu.memory_space<vmem>>, vector<3x2xf32>
      %cst_74 = arith.constant dense<0.000000e+00> : vector<6x2xf32>
      %82 = tpu.matmul %78, %81, %cst_74 {dimension_numbers = #tpu.dot_dimension_numbers<[1], [0], [0], [1], [0, 0, 1, 1], [], []>} : vector<6x3xf32>, vector<3x2xf32>, vector<6x2xf32> -> vector<6x2xf32>
      %83 = tpu.transpose %80, [1, 0] : vector<6x2xf32> -> vector<2x6xf32>
      %84 = vector.shape_cast %83 : vector<2x6xf32> to vector<2x1x6xf32>
      %c0_75 = arith.constant 0 : index
      %c0_76 = arith.constant 0 : index
      %c0_77 = arith.constant 0 : index
      %c0_78 = arith.constant 0 : index
      %85 = vector.load %arg9[%c0_75, %c0_76, %c0_77, %c0_78] : memref<1x2x1x6xf32, #tpu.memory_space<vmem>>, vector<1x2x1x6xf32>
      %86 = vector.shape_cast %85 : vector<1x2x1x6xf32> to vector<2x1x6xf32>
      %87 = vector.shape_cast %84 : vector<2x1x6xf32> to vector<1x2x1x6xf32>
      tpu.vector_store %arg9[%c0_75, %c0_76, %c0_77, %c0_78], %87 {strides = array<i32>} : memref<1x2x1x6xf32, #tpu.memory_space<vmem>>, vector<1x2x1x6xf32>,
      %88 = tpu.transpose %82, [1, 0] : vector<6x2xf32> -> vector<2x6xf32>
      %89 = vector.shape_cast %88 : vector<2x6xf32> to vector<2x1x6xf32>
      %90 = tpu.transpose %89, [0, 2, 1] : vector<2x1x6xf32> -> vector<2x6x1xf32>
      %c0_79 = arith.constant 0 : index
      %c0_80 = arith.constant 0 : index
      %c0_81 = arith.constant 0 : index
      %c0_82 = arith.constant 0 : index
      %91 = vector.load %arg10[%c0_79, %c0_80, %c0_81, %c0_82] : memref<1x2x6x1xf32, #tpu.memory_space<vmem>>, vector<1x2x6x1xf32>
      %92 = vector.shape_cast %91 : vector<1x2x6x1xf32> to vector<2x6x1xf32>
      %93 = vector.shape_cast %90 : vector<2x6x1xf32> to vector<1x2x6x1xf32>
      tpu.vector_store %arg10[%c0_79, %c0_80, %c0_81, %c0_82], %93 {strides = array<i32>} : memref<1x2x6x1xf32, #tpu.memory_space<vmem>>, vector<1x2x6x1xf32>,
    } else {
    }
    %c6_i32 = arith.constant 6 : i32
    %3 = arith.muli %arg1, %c6_i32 : i32
    %4 = tpu.assume_multiple %3, 6 : i32
    %c0 = arith.constant 0 : index
    %5 = arith.index_cast %4 : i32 to index
    %c0_1 = arith.constant 0 : index
    %6 = vector.load %arg2[%c0, %5, %c0_1] : memref<1x6x3xf32, #tpu.memory_space<vmem>>, vector<1x6x3xf32>
    %7 = vector.shape_cast %6 : vector<1x6x3xf32> to vector<6x3xf32>
    %c0_2 = arith.constant 0 : index
    %c0_3 = arith.constant 0 : index
    %8 = vector.load %arg3[%c0_2, %c0_3] : memref<3x2xf32, #tpu.memory_space<vmem>>, vector<3x2xf32>
    %cst = arith.constant dense<0.000000e+00> : vector<6x2xf32>
    %9 = tpu.matmul %7, %8, %cst {dimension_numbers = #tpu.dot_dimension_numbers<[1], [0], [0], [1], [0, 0, 1, 1], [], []>} : vector<6x3xf32>, vector<3x2xf32>, vector<6x2xf32> -> vector<6x2xf32>
    %cst_4 = arith.constant 1.000000e+00 : f32
    %10 = vector.broadcast %cst_4 : f32 to vector<6x2xf32>
    %11 = arith.mulf %9, %10 : vector<6x2xf32>
    %12 = tpu.transpose %11, [1, 0] : vector<6x2xf32> -> vector<2x6xf32>
    %13 = vector.shape_cast %12 : vector<2x6xf32> to vector<2x1x6xf32>
    %14 = tpu.transpose %13, [0, 2, 1] : vector<2x1x6xf32> -> vector<2x6x1xf32>
    %cst_5 = arith.constant -1.000000e+30 : f32
    %15 = vector.broadcast %cst_5 : f32 to vector<2x6x1xf32>
    %c0_6 = arith.constant 0 : index
    %c0_7 = arith.constant 0 : index
    %c0_8 = arith.constant 0 : index
    %16 = vector.load %arg11[%c0_6, %c0_7, %c0_8] : memref<2x6x1xf32, #tpu.memory_space<vmem>>, vector<2x6x1xf32>
    tpu.vector_store %arg11[%c0_6, %c0_7, %c0_8], %15 {strides = array<i32>} : memref<2x6x1xf32, #tpu.memory_space<vmem>>, vector<2x6x1xf32>,
    %cst_9 = arith.constant 0.000000e+00 : f32
    %17 = vector.broadcast %cst_9 : f32 to vector<2x6x1xf32>
    %c0_10 = arith.constant 0 : index
    %c0_11 = arith.constant 0 : index
    %c0_12 = arith.constant 0 : index
    %18 = vector.load %arg12[%c0_10, %c0_11, %c0_12] : memref<2x6x1xf32, #tpu.memory_space<vmem>>, vector<2x6x1xf32>
    tpu.vector_store %arg12[%c0_10, %c0_11, %c0_12], %17 {strides = array<i32>} : memref<2x6x1xf32, #tpu.memory_space<vmem>>, vector<2x6x1xf32>,
    %cst_13 = arith.constant 0.000000e+00 : f32
    %19 = vector.broadcast %cst_13 : f32 to vector<2x6x1xf32>
    %c0_14 = arith.constant 0 : index
    %c0_15 = arith.constant 0 : index
    %c0_16 = arith.constant 0 : index
    %20 = vector.load %arg13[%c0_14, %c0_15, %c0_16] : memref<2x6x1xf32, #tpu.memory_space<vmem>>, vector<2x6x1xf32>
    tpu.vector_store %arg13[%c0_14, %c0_15, %c0_16], %19 {strides = array<i32>} : memref<2x6x1xf32, #tpu.memory_space<vmem>>, vector<2x6x1xf32>,
    %c0_i32_17 = arith.constant 0 : i32
    %c1_i32 = arith.constant 1 : i32
    %21 = arith.muli %c0_i32_17, %c1_i32 : i32
    %c0_i32_18 = arith.constant 0 : i32
    %22 = arith.addi %c0_i32_18, %21 : i32
    %23 = arith.index_cast %22 : i32 to index
    %c0_19 = arith.constant 0 : index
    %c0_20 = arith.constant 0 : index
    %c0_21 = arith.constant 0 : index
    %24 = vector.load %arg9[%23, %c0_19, %c0_20, %c0_21] : memref<1x2x1x6xf32, #tpu.memory_space<vmem>>, vector<1x2x1x6xf32>
    %25 = vector.shape_cast %24 : vector<1x2x1x6xf32> to vector<2x1x6xf32>
    %26 = arith.index_cast %22 : i32 to index
    %c0_22 = arith.constant 0 : index
    %c0_23 = arith.constant 0 : index
    %c0_24 = arith.constant 0 : index
    %27 = vector.load %arg10[%26, %c0_22, %c0_23, %c0_24] : memref<1x2x6x1xf32, #tpu.memory_space<vmem>>, vector<1x2x6x1xf32>
    %28 = vector.shape_cast %27 : vector<1x2x6x1xf32> to vector<2x6x1xf32>
    "tpu.trace_start"() <{level = 10 : i32, message = "hqd,hdk->hqk"}> : () -> ()
    %cst_25 = arith.constant dense<0.000000e+00> : vector<2x6x6xf32>
    %29 = tpu.matmul %14, %25, %cst_25 {dimension_numbers = #tpu.dot_dimension_numbers<[2], [1], [1], [2], [0, 0, 0, 1, 1, 2], [0], [0]>} : vector<2x6x1xf32>, vector<2x1x6xf32>, vector<2x6x6xf32> -> vector<2x6x6xf32>
    "tpu.trace_stop"() : () -> ()
    %c6_i32_26 = arith.constant 6 : i32
    %30 = arith.muli %22, %c6_i32_26 : i32
    %31 = tpu.iota {dimensions = array<i32: 0>} : vector<6x6xi32>
    %32 = vector.broadcast %4 : i32 to vector<6x6xi32>
    %33 = arith.addi %32, %31 : vector<6x6xi32>
    %34 = tpu.iota {dimensions = array<i32: 1>} : vector<6x6xi32>
    %35 = vector.broadcast %30 : i32 to vector<6x6xi32>
    %36 = arith.addi %35, %34 : vector<6x6xi32>
    %37 = arith.cmpi sgt, %36, %33 : vector<6x6xi32>
    %38 = vector.shape_cast %37 : vector<6x6xi1> to vector<1x6x6xi1>
    %cst_27 = arith.constant -1.000000e+30 : f32
    %39 = vector.shape_cast %38 : vector<1x6x6xi1> to vector<1x6x6xi1>
    %40 = vector.broadcast %39 : vector<1x6x6xi1> to vector<2x6x6xi1>
    %41 = vector.broadcast %cst_27 : f32 to vector<2x6x6xf32>
    %42 = arith.select %40, %41, %29 : vector<2x6x6xi1>, vector<2x6x6xf32>
    %c0_28 = arith.constant 0 : index
    %c0_29 = arith.constant 0 : index
    %c0_30 = arith.constant 0 : index
    %43 = vector.load %arg11[%c0_28, %c0_29, %c0_30] : memref<2x6x1xf32, #tpu.memory_space<vmem>>, vector<2x6x1xf32>
    %cst_31 = arith.constant dense<0xFF800000> : vector<2x6xf32>
    %44 = vector.multi_reduction <maximumf>, %42, %cst_31 [2] : vector<2x6x6xf32> to vector<2x6xf32>
    %45 = vector.shape_cast %44 : vector<2x6xf32> to vector<2x6x1xf32>
    %46 = arith.maximumf %43, %45 : vector<2x6x1xf32>
    %47 = arith.subf %43, %46 : vector<2x6x1xf32>
    %48 = math.exp %47 : vector<2x6x1xf32>
    %49 = vector.broadcast %46 : vector<2x6x1xf32> to vector<2x6x6xf32>
    %50 = arith.subf %42, %49 : vector<2x6x6xf32>
    %51 = math.exp %50 : vector<2x6x6xf32>
    %c0_32 = arith.constant 0 : index
    %c0_33 = arith.constant 0 : index
    %c0_34 = arith.constant 0 : index
    %52 = vector.load %arg12[%c0_32, %c0_33, %c0_34] : memref<2x6x1xf32, #tpu.memory_space<vmem>>, vector<2x6x1xf32>
    %53 = arith.mulf %48, %52 : vector<2x6x1xf32>
    %cst_35 = arith.constant dense<0.000000e+00> : vector<2x6xf32>
    %54 = vector.multi_reduction <add>, %51, %cst_35 [2] : vector<2x6x6xf32> to vector<2x6xf32>
    %55 = vector.shape_cast %54 : vector<2x6xf32> to vector<2x6x1xf32>
    %56 = arith.addf %53, %55 : vector<2x6x1xf32>
    %c0_36 = arith.constant 0 : index
    %c0_37 = arith.constant 0 : index
    %c0_38 = arith.constant 0 : index
    %57 = vector.load %arg12[%c0_36, %c0_37, %c0_38] : memref<2x6x1xf32, #tpu.memory_space<vmem>>, vector<2x6x1xf32>
    tpu.vector_store %arg12[%c0_36, %c0_37, %c0_38], %56 {strides = array<i32>} : memref<2x6x1xf32, #tpu.memory_space<vmem>>, vector<2x6x1xf32>,
    %c0_39 = arith.constant 0 : index
    %c0_40 = arith.constant 0 : index
    %c0_41 = arith.constant 0 : index
    %58 = vector.load %arg13[%c0_39, %c0_40, %c0_41] : memref<2x6x1xf32, #tpu.memory_space<vmem>>, vector<2x6x1xf32>
    %59 = arith.mulf %48, %58 : vector<2x6x1xf32>
    "tpu.trace_start"() <{level = 10 : i32, message = "hqk,hkd->hqd"}> : () -> ()
    %cst_42 = arith.constant dense<0.000000e+00> : vector<2x6x1xf32>
    %60 = tpu.matmul %51, %28, %cst_42 {dimension_numbers = #tpu.dot_dimension_numbers<[2], [1], [1], [2], [0, 0, 0, 1, 1, 2], [0], [0]>} : vector<2x6x6xf32>, vector<2x6x1xf32>, vector<2x6x1xf32> -> vector<2x6x1xf32>
    "tpu.trace_stop"() : () -> ()
    %61 = arith.addf %59, %60 : vector<2x6x1xf32>
    %c0_43 = arith.constant 0 : index
    %c0_44 = arith.constant 0 : index
    %c0_45 = arith.constant 0 : index
    %62 = vector.load %arg13[%c0_43, %c0_44, %c0_45] : memref<2x6x1xf32, #tpu.memory_space<vmem>>, vector<2x6x1xf32>
    tpu.vector_store %arg13[%c0_43, %c0_44, %c0_45], %61 {strides = array<i32>} : memref<2x6x1xf32, #tpu.memory_space<vmem>>, vector<2x6x1xf32>,
    %c0_46 = arith.constant 0 : index
    %c0_47 = arith.constant 0 : index
    %c0_48 = arith.constant 0 : index
    %63 = vector.load %arg11[%c0_46, %c0_47, %c0_48] : memref<2x6x1xf32, #tpu.memory_space<vmem>>, vector<2x6x1xf32>
    tpu.vector_store %arg11[%c0_46, %c0_47, %c0_48], %46 {strides = array<i32>} : memref<2x6x1xf32, #tpu.memory_space<vmem>>, vector<2x6x1xf32>,
    %c1_i32_49 = arith.constant 1 : i32
    %c0_50 = arith.constant 0 : index
    %c0_51 = arith.constant 0 : index
    %c0_52 = arith.constant 0 : index
    %64 = vector.load %arg13[%c0_50, %c0_51, %c0_52] : memref<2x6x1xf32, #tpu.memory_space<vmem>>, vector<2x6x1xf32>
    %c0_53 = arith.constant 0 : index
    %c0_54 = arith.constant 0 : index
    %c0_55 = arith.constant 0 : index
    %65 = vector.load %arg12[%c0_53, %c0_54, %c0_55] : memref<2x6x1xf32, #tpu.memory_space<vmem>>, vector<2x6x1xf32>
    %66 = tpu.reciprocal %65 {approx = true} : vector<2x6x1xf32> -> vector<2x6x1xf32>
    %67 = arith.mulf %64, %66 : vector<2x6x1xf32>
    %c0_56 = arith.constant 0 : index
    %c0_57 = arith.constant 0 : index
    %c0_58 = arith.constant 0 : index
    %68 = vector.load %arg6[%c0_56, %c0_57, %c0_58] : memref<2x1x2xf32, #tpu.memory_space<vmem>>, vector<2x1x2xf32>
    "tpu.trace_start"() <{level = 10 : i32, message = "hqd,hde->hqe"}> : () -> ()
    %cst_59 = arith.constant dense<0.000000e+00> : vector<2x6x2xf32>
    %69 = tpu.matmul %67, %68, %cst_59 {dimension_numbers = #tpu.dot_dimension_numbers<[2], [1], [1], [2], [0, 0, 0, 1, 1, 2], [0], [0]>} : vector<2x6x1xf32>, vector<2x1x2xf32>, vector<2x6x2xf32> -> vector<2x6x2xf32>
    "tpu.trace_stop"() : () -> ()
    %cst_60 = arith.constant dense<0.000000e+00> : vector<6x2xf32>
    %70 = vector.multi_reduction <add>, %69, %cst_60 [0] : vector<2x6x2xf32> to vector<6x2xf32>
    %c0_61 = arith.constant 0 : index
    %c0_62 = arith.constant 0 : index
    %71 = vector.load %arg7[%c0_61, %c0_62] : memref<1x2xf32, #tpu.memory_space<vmem>>, vector<1x2xf32>
    %72 = vector.broadcast %71 : vector<1x2xf32> to vector<6x2xf32>
    %73 = arith.addf %70, %72 : vector<6x2xf32>
    %c0_63 = arith.constant 0 : index
    %c0_64 = arith.constant 0 : index
    %c0_65 = arith.constant 0 : index
    %74 = vector.load %arg8[%c0_63, %c0_64, %c0_65] : memref<1x6x2xf32, #tpu.memory_space<vmem>>, vector<1x6x2xf32>
    %75 = vector.shape_cast %74 : vector<1x6x2xf32> to vector<6x2xf32>
    %76 = vector.shape_cast %73 : vector<6x2xf32> to vector<1x6x2xf32>
    tpu.vector_store %arg8[%c0_63, %c0_64, %c0_65], %76 {strides = array<i32>} : memref<1x6x2xf32, #tpu.memory_space<vmem>>, vector<1x6x2xf32>,
    return
  }
  func.func @transform_0(%arg0: i32, %arg1: i32) -> (i32, i32, i32) {
    %c0_i32 = arith.constant 0 : i32
    %c0_i32_0 = arith.constant 0 : i32
    %c0_i32_1 = arith.constant 0 : i32
    return %arg0, %c0_i32, %c0_i32_0 : i32, i32, i32
  }
  func.func @transform_1(%arg0: i32, %arg1: i32) -> (i32, i32) {
    %c0_i32 = arith.constant 0 : i32
    %c0_i32_0 = arith.constant 0 : i32
    %c0_i32_1 = arith.constant 0 : i32
    return %c0_i32, %c0_i32_0 : i32, i32
  }
  func.func @transform_2(%arg0: i32, %arg1: i32) -> (i32, i32) {
    %c0_i32 = arith.constant 0 : i32
    %c0_i32_0 = arith.constant 0 : i32
    %c0_i32_1 = arith.constant 0 : i32
    return %c0_i32, %c0_i32_0 : i32, i32
  }
  func.func @transform_3(%arg0: i32, %arg1: i32) -> (i32, i32) {
    %c0_i32 = arith.constant 0 : i32
    %c0_i32_0 = arith.constant 0 : i32
    %c0_i32_1 = arith.constant 0 : i32
    return %c0_i32, %c0_i32_0 : i32, i32
  }
  func.func @transform_4(%arg0: i32, %arg1: i32) -> (i32, i32, i32) {
    %c0_i32 = arith.constant 0 : i32
    %c0_i32_0 = arith.constant 0 : i32
    %c0_i32_1 = arith.constant 0 : i32
    %c0_i32_2 = arith.constant 0 : i32
    return %c0_i32, %c0_i32_0, %c0_i32_1 : i32, i32, i32
  }
  func.func @transform_5(%arg0: i32, %arg1: i32) -> (i32, i32) {
    %c0_i32 = arith.constant 0 : i32
    %c0_i32_0 = arith.constant 0 : i32
    %c0_i32_1 = arith.constant 0 : i32
    return %c0_i32, %c0_i32_0 : i32, i32
  }
  func.func @transform_6(%arg0: i32, %arg1: i32) -> (i32, i32, i32) {
    %c0_i32 = arith.constant 0 : i32
    %c0_i32_0 = arith.constant 0 : i32
    return %arg0, %arg1, %c0_i32 : i32, i32, i32
  }
}

</mosaic_0001>

<llo_original>
// kernel: tpu_custom_call.1
$region0: #{tpu_custom_call.1}
  #allocation0 [shape = 'u32[]', space=smem, size = 0x4, offset = 0x4, fixed_abs, tag = 'smem constant byte address 0x4 - core index']
  #allocation1 [shape = 'u32[72,128]{1,0:T(1,128)}', space=vmem, size = 0x9000, scoped, tag = 'internal scratch']
  #allocation2 [shape = 'f32[1,2,1,6]{3,2,1,0:T(1,128)}', space=vmem, size = 0x400, scoped, tag = 'scratch operand']
  #allocation3 [shape = 'f32[1,2,6,1]{3,2,1,0:T(8,128)}', space=vmem, size = 0x2000, scoped, tag = 'scratch operand']
  #allocation4 [shape = 'f32[2,6,1]{2,1,0:T(8,128)}', space=vmem, size = 0x2000, scoped, tag = 'scratch operand']
  #allocation5 [shape = 'f32[2,6,1]{2,1,0:T(8,128)}', space=vmem, size = 0x2000, scoped, tag = 'scratch operand']
  #allocation6 [shape = 'f32[2,6,1]{2,1,0:T(8,128)}', space=vmem, size = 0x2000, scoped, tag = 'scratch operand']
  %s0 = inlined_call_operand.vmem [shape: f32[2,6,3], index: 0, kind: input, shape index: {}]
  %s1 = inlined_call_operand.vmem [shape: f32[3,2], index: 1, kind: input, shape index: {}]
  %s2 = inlined_call_operand.vmem [shape: f32[3,2], index: 2, kind: input, shape index: {}]
  %s3 = inlined_call_operand.vmem [shape: f32[3,2], index: 3, kind: input, shape index: {}]
  %s4 = inlined_call_operand.vmem [shape: f32[2,1,2], index: 4, kind: input, shape index: {}]
  %s5 = inlined_call_operand.vmem [shape: f32[1,2], index: 5, kind: input, shape index: {}]
  %s6 = inlined_call_operand.vmem [shape: f32[2,6,2], index: 6, kind: output, shape index: {}]
  %s7 = sld [smem:[#allocation0]]
  $region61: #{tpu_custom_call.1} parent=0
    _
  %s9 = ssub.s32 1, %s7
  %s10 = scalar_select 0, %s9, %s7
  loop: start=0, step=1, limit=4
  $region2: #{tpu_custom_call.1} parent=0 // loop_pre_header
    _
  $region3: #{tpu_custom_call.1} parent=0 // loop_header
    %s12 = sphi 0, %s16
    %p13 = scmp.ge.s32.totalorder %s12, 4
    %s19 = sphi 0, %s31
    %s20 = sphi 0, %s27
    %s21 = sphi 0, %s19
    %s22 = sphi 0, %s20
    %s23 = sphi 0, %s21
    %s24 = sphi 0, %s22
    %s34 = sphi 0, %s36
    %s37 = sphi 0, %s34
    %s38 = sphi 0, %s37
    %s54 = sphi 0, %s38
    %s58 = sphi 0, %s58
    %s60 = sphi 0, %s58
    %s61 = sphi 0, %s60
    %s75 = sphi 0, %s61
    %s79 = sphi 0, %s79
    %s81 = sphi 0, %s79
    %s82 = sphi 0, %s81
    %s96 = sphi 0, %s82
    %s100 = sphi 0, %s100
    %s102 = sphi 0, %s100
    %s103 = sphi 0, %s102
    %s117 = sphi 0, %s103
    %s121 = sphi 0, %s121
    %s123 = sphi 0, %s121
    %s124 = sphi 0, %s123
    %s138 = sphi 0, %s124
    %s142 = sphi 0, %s142
    %s144 = sphi 0, %s142
    %s145 = sphi 0, %s144
    %s159 = sphi 0, %s145
    %s167 = sphi 0, %s169
    %s170 = sphi 0, %s167
    %s171 = sphi 0, %s170
    %s187 = sphi 0, %s171
  $region4: #{tpu_custom_call.1} parent=0 // loop_header_branch
    %15 = sbr.rel (%p13) target = $region8
  $region5: #{tpu_custom_call.1} parent=0 // loop_body
    %s17 = ssub.s32 %s12, 1
    %s18 = ssub.s32 %s12, 2
    %s25 = sadd.s32 1, %s20
    %p26 = scmp.ge.s32.totalorder %s25, 1
    %s27 = scalar_select %p26, 0, %s25
    %s28 = sadd.s32 1, %s19
    %s29 = scalar_select %p26, %s28, %s19
    %p30 = scmp.ge.s32.totalorder %s29, 2
    %s31 = scalar_select %p30, 0, %s29
    %s32 = ssub.s32 %s19, %s31
    %p33 = scmp.eq.s32.totalorder %s32, 0
    %s35 = sadd.s32 %s34, 1
    %s36 = scalar_select %p33, %s34, %s35
    %p39 = pneg %p33
    %p40 = scmp.eq.s32.totalorder %s12, 1
    %p41 = por %p39, %p40
    %p42 = scmp.ne.s32.totalorder %s34, %s37
    %p43 = scmp.eq.s32.totalorder %s12, 0
    %p44 = por %p42, %p43
    %p45 = scmp.ne.s32.totalorder %s34, %s37
    %p46 = scmp.eq.s32.totalorder %s17, 1
    %p47 = por %p45, %p46
    %p48 = scmp.ne.s32.totalorder %s37, %s38
    %p49 = scmp.eq.s32.totalorder %s17, 0
    %p50 = por %p48, %p49
    %p51 = scmp.ne.s32.totalorder %s37, %s38
    %p52 = scmp.eq.s32.totalorder %s18, 1
    %p53 = por %p51, %p52
    %p55 = scmp.ne.s32.totalorder %s38, %s54
    %p56 = scmp.eq.s32.totalorder %s18, 0
    %p57 = por %p55, %p56
    %s59 = sadd.s32 %s58, 1
    %p62 = scmp.eq.s32.totalorder %s12, 1
    %p63 = scmp.ne.s32.totalorder %s58, %s60
    %p64 = scmp.eq.s32.totalorder %s12, 0
    %p65 = por %p63, %p64
    %p66 = scmp.ne.s32.totalorder %s58, %s60
    %p67 = scmp.eq.s32.totalorder %s17, 1
    %p68 = por %p66, %p67
    %p69 = scmp.ne.s32.totalorder %s60, %s61
    %p70 = scmp.eq.s32.totalorder %s17, 0
    %p71 = por %p69, %p70
    %p72 = scmp.ne.s32.totalorder %s60, %s61
    %p73 = scmp.eq.s32.totalorder %s18, 1
    %p74 = por %p72, %p73
    %p76 = scmp.ne.s32.totalorder %s61, %s75
    %p77 = scmp.eq.s32.totalorder %s18, 0
    %p78 = por %p76, %p77
    %s80 = sadd.s32 %s79, 1
    %p83 = scmp.eq.s32.totalorder %s12, 1
    %p84 = scmp.ne.s32.totalorder %s79, %s81
    %p85 = scmp.eq.s32.totalorder %s12, 0
    %p86 = por %p84, %p85
    %p87 = scmp.ne.s32.totalorder %s79, %s81
    %p88 = scmp.eq.s32.totalorder %s17, 1
    %p89 = por %p87, %p88
    %p90 = scmp.ne.s32.totalorder %s81, %s82
    %p91 = scmp.eq.s32.totalorder %s17, 0
    %p92 = por %p90, %p91
    %p93 = scmp.ne.s32.totalorder %s81, %s82
    %p94 = scmp.eq.s32.totalorder %s18, 1
    %p95 = por %p93, %p94
    %p97 = scmp.ne.s32.totalorder %s82, %s96
    %p98 = scmp.eq.s32.totalorder %s18, 0
    %p99 = por %p97, %p98
    %s101 = sadd.s32 %s100, 1
    %p104 = scmp.eq.s32.totalorder %s12, 1
    %p105 = scmp.ne.s32.totalorder %s100, %s102
    %p106 = scmp.eq.s32.totalorder %s12, 0
    %p107 = por %p105, %p106
    %p108 = scmp.ne.s32.totalorder %s100, %s102
    %p109 = scmp.eq.s32.totalorder %s17, 1
    %p110 = por %p108, %p109
    %p111 = scmp.ne.s32.totalorder %s102, %s103
    %p112 = scmp.eq.s32.totalorder %s17, 0
    %p113 = por %p111, %p112
    %p114 = scmp.ne.s32.totalorder %s102, %s103
    %p115 = scmp.eq.s32.totalorder %s18, 1
    %p116 = por %p114, %p115
    %p118 = scmp.ne.s32.totalorder %s103, %s117
    %p119 = scmp.eq.s32.totalorder %s18, 0
    %p120 = por %p118, %p119
    %s122 = sadd.s32 %s121, 1
    %p125 = scmp.eq.s32.totalorder %s12, 1
    %p126 = scmp.ne.s32.totalorder %s121, %s123
    %p127 = scmp.eq.s32.totalorder %s12, 0
    %p128 = por %p126, %p127
    %p129 = scmp.ne.s32.totalorder %s121, %s123
    %p130 = scmp.eq.s32.totalorder %s17, 1
    %p131 = por %p129, %p130
    %p132 = scmp.ne.s32.totalorder %s123, %s124
    %p133 = scmp.eq.s32.totalorder %s17, 0
    %p134 = por %p132, %p133
    %p135 = scmp.ne.s32.totalorder %s123, %s124
    %p136 = scmp.eq.s32.totalorder %s18, 1
    %p137 = por %p135, %p136
    %p139 = scmp.ne.s32.totalorder %s124, %s138
    %p140 = scmp.eq.s32.totalorder %s18, 0
    %p141 = por %p139, %p140
    %s143 = sadd.s32 %s142, 1
    %p146 = scmp.eq.s32.totalorder %s12, 1
    %p147 = scmp.ne.s32.totalorder %s142, %s144
    %p148 = scmp.eq.s32.totalorder %s12, 0
    %p149 = por %p147, %p148
    %p150 = scmp.ne.s32.totalorder %s142, %s144
    %p151 = scmp.eq.s32.totalorder %s17, 1
    %p152 = por %p150, %p151
    %p153 = scmp.ne.s32.totalorder %s144, %s145
    %p154 = scmp.eq.s32.totalorder %s17, 0
    %p155 = por %p153, %p154
    %p156 = scmp.ne.s32.totalorder %s144, %s145
    %p157 = scmp.eq.s32.totalorder %s18, 1
    %p158 = por %p156, %p157
    %p160 = scmp.ne.s32.totalorder %s145, %s159
    %p161 = scmp.eq.s32.totalorder %s18, 0
    %p162 = por %p160, %p161
    %s163 = ssub.s32 %s19, %s31
    %s164 = ssub.s32 %s20, %s27
    %s165 = sor.u32 %s163, %s164
    %p166 = scmp.eq.s32.totalorder %s165, 0
    %s168 = sadd.s32 %s167, 1
    %s169 = scalar_select %p166, %s167, %s168
    %p172 = pneg %p166
    %p173 = scmp.eq.s32.totalorder %s12, 1
    %p174 = por %p172, %p173
    %p175 = scmp.ne.s32.totalorder %s167, %s170
    %p176 = scmp.eq.s32.totalorder %s12, 0
    %p177 = por %p175, %p176
    %p178 = scmp.ne.s32.totalorder %s167, %s170
    %p179 = scmp.eq.s32.totalorder %s17, 1
    %p180 = por %p178, %p179
    %p181 = scmp.ne.s32.totalorder %s170, %s171
    %p182 = scmp.eq.s32.totalorder %s17, 0
    %p183 = por %p181, %p182
    %p184 = scmp.ne.s32.totalorder %s170, %s171
    %p185 = scmp.eq.s32.totalorder %s18, 1
    %p186 = por %p184, %p185
    %p188 = scmp.ne.s32.totalorder %s171, %s187
    %p189 = scmp.eq.s32.totalorder %s18, 0
    %p190 = por %p188, %p189
    %p191 = scmp.le.s32.totalorder 1, %s12
    %p192 = scmp.lt.s32.totalorder %s12, 3
    %p193 = pnand %p191, %p192
    %p194 = pneg %p193
    // Predicated region
    $region9: #{tpu_custom_call.1} parent=5 // pred_check
      _
    $region10: #{tpu_custom_call.1} parent=5 // pred_check_branch
      %196 = sbr.rel (%p193) target = $region12
    $region11: #{tpu_custom_call.1} parent=5 // pred_region
      %s197 = ssub.s32 %s12, 1
      // Predicated region
      $region13: #{tpu_custom_call.1} parent=11 // pred_check
        %p198 = pneg %p71
      $region14: #{tpu_custom_call.1} parent=11 // pred_check_branch
        %200 = sbr.rel (%p198) target = $region16
      $region15: #{tpu_custom_call.1} parent=11 // pred_region
        _
      $region16: #{tpu_custom_call.1} parent=11 // pred_fallthru
        _
      // Predicated region
      $region17: #{tpu_custom_call.1} parent=11 // pred_check
        %p201 = pneg %p92
      $region18: #{tpu_custom_call.1} parent=11 // pred_check_branch
        %203 = sbr.rel (%p201) target = $region20
      $region19: #{tpu_custom_call.1} parent=11 // pred_region
        _
      $region20: #{tpu_custom_call.1} parent=11 // pred_fallthru
        _
      // Predicated region
      $region21: #{tpu_custom_call.1} parent=11 // pred_check
        %p204 = pneg %p113
      $region22: #{tpu_custom_call.1} parent=11 // pred_check_branch
        %206 = sbr.rel (%p204) target = $region24
      $region23: #{tpu_custom_call.1} parent=11 // pred_region
        _
      $region24: #{tpu_custom_call.1} parent=11 // pred_fallthru
        _
      // Predicated region
      $region25: #{tpu_custom_call.1} parent=11 // pred_check
        %p207 = pneg %p134
      $region26: #{tpu_custom_call.1} parent=11 // pred_check_branch
        %209 = sbr.rel (%p207) target = $region28
      $region27: #{tpu_custom_call.1} parent=11 // pred_region
        _
      $region28: #{tpu_custom_call.1} parent=11 // pred_fallthru
        _
      // Predicated region
      $region29: #{tpu_custom_call.1} parent=11 // pred_check
        %p210 = pneg %p155
      $region30: #{tpu_custom_call.1} parent=11 // pred_check_branch
        %212 = sbr.rel (%p210) target = $region32
      $region31: #{tpu_custom_call.1} parent=11 // pred_region
        _
      $region32: #{tpu_custom_call.1} parent=11 // pred_fallthru
        _
    $region12: #{tpu_custom_call.1} parent=5 // pred_fallthru
      _
    %p213 = scmp.lt.s32.totalorder %s12, 2
    // Predicated region
    $region33: #{tpu_custom_call.1} parent=5 // pred_check
      %p214 = pneg %p213
    $region34: #{tpu_custom_call.1} parent=5 // pred_check_branch
      %216 = sbr.rel (%p214) target = $region36
    $region35: #{tpu_custom_call.1} parent=5 // pred_region
      // Predicated region
      $region37: #{tpu_custom_call.1} parent=35 // pred_check
        %p217 = pneg %p44
      $region38: #{tpu_custom_call.1} parent=35 // pred_check_branch
        %219 = sbr.rel (%p217) target = $region40
      $region39: #{tpu_custom_call.1} parent=35 // pred_region
        %p220 = scmp.lt.s32.totalorder %s19, 1
        %s221 = scalar_select %p220, %s19, 1
        %s222 = smul.addr %s221, 8
        %s223 = scalar_lea.vmem %s0, %s222
      $region40: #{tpu_custom_call.1} parent=35 // pred_fallthru
        _
    $region36: #{tpu_custom_call.1} parent=5 // pred_fallthru
      _
    %p224 = scmp.le.s32.totalorder 1, %s12
    %p225 = scmp.lt.s32.totalorder %s12, 3
    %p226 = pnand %p224, %p225
    %p227 = pneg %p226
    // Predicated region
    $region41: #{tpu_custom_call.1} parent=5 // pred_check
      _
    $region42: #{tpu_custom_call.1} parent=5 // pred_check_branch
      %229 = sbr.rel (%p226) target = $region44
    $region43: #{tpu_custom_call.1} parent=5 // pred_region
      %s230 = ssub.s32 %s12, 1
      %p231 = scmp.lt.s32.totalorder %s21, 1
      %s232 = scalar_select %p231, %s21, 1
      %s233 = smul.addr %s232, 8
      %s234 = scalar_lea.vmem %s0, %s233
      %p235 = pneg %p50
      %p236 = pneg %p47
      %p237 = pneg %p71
      %p238 = pneg %p68
      %p239 = pneg %p92
      %p240 = pneg %p89
      %p241 = pneg %p113
      %p242 = pneg %p110
      %p243 = pneg %p134
      %p244 = pneg %p131
      %p245 = pneg %p155
      %p246 = pneg %p152
      %p247 = pneg %p183
      %p248 = pneg %p180
      %p249 = scmp.lt.s32.totalorder %s21, 1
      %s250 = scalar_select %p249, %s21, 1
      %p251 = scmp.lt.s32.totalorder %s22, 0
      %s252 = scalar_select %p251, %s22, 0
      %s253 = sadd.s32 %s252, %s250
      %s254 = smul.addr %s253, 8
      %s255 = scalar_lea.vmem %s6, %s254
      %p256 = scmp.lt.s32.totalorder %s21, 1
      %s257 = scalar_select %p256, %s21, 1
      %s258 = smul.addr %s257, 8
      %s259 = scalar_lea.vmem %s0, %s258
      %p260 = scmp.lt.s32.totalorder %s21, 1
      %s261 = scalar_select %p260, %s21, 1
      %p262 = scmp.lt.s32.totalorder %s22, 0
      %s263 = scalar_select %p262, %s22, 0
      %s264 = sadd.s32 %s263, %s261
      %s265 = smul.addr %s264, 8
      %s266 = scalar_lea.vmem %s6, %s265
      %p267 = scmp.eq.s32.totalorder %s22, 0
      // Predicated region
      $region45: #{tpu_custom_call.1} parent=43 // pred_check
        %p268 = pneg %p267
      $region46: #{tpu_custom_call.1} parent=43 // pred_check_branch
        %270 = sbr.rel (%p268) target = $region48
      $region47: #{tpu_custom_call.1} parent=43 // pred_region
        %v271 = vld [vmem:[%s259] sm:$0x3f]
        %v272 = vld [vmem:[%s2] sm:$0x7]
        %vm273 = vcmask 23552
        %v275 = vsel %vm273, %v271, 0
        %vm277 = vcmask 1042432
        %v279 = vsel %vm277, %v272, 0
        %281 = vmatpush.msra.mxu0 0.0
        %282 = vmatpush.msra.mxu0 0.0
        %283 = vmatpush.msra.mxu0 0.0
        %284 = vmatpush.msra.mxu0 0.0
        %285 = vmatpush.msra.mxu0 0.0
        %286 = vmatpush.msra.mxu0 0.0
        %287 = vmatpush.msra.mxu0 0.0
        %288 = vmatpush.msra.mxu0 0.0
        %289 = vmatpush.msra.mxu0 0.0
        %290 = vmatpush.msra.mxu0 0.0
        %291 = vmatpush.msra.mxu0 0.0
        %292 = vmatpush.msra.mxu0 0.0
        %293 = vmatpush.msra.mxu0 0.0
        %294 = vmatpush.msra.mxu0 0.0
        %295 = vmatpush.msra.mxu0 0.0
        %296 = vmatpush.msra.mxu0 %v279
        %297 = vmatmul.f32.gmra.mxu0 %v275
        %v298 = vpop.f32.mrf.mxu0
        %v299 = vadd.f32 0.0, %v298
        %300 = vdwg.mxu0
        %v301 = vld [vmem:[%s3] sm:$0x7]
        %v303 = vsel %vm277, %v301, 0
        %305 = vmatpush.msra.mxu0 0.0
        %306 = vmatpush.msra.mxu0 0.0
        %307 = vmatpush.msra.mxu0 0.0
        %308 = vmatpush.msra.mxu0 0.0
        %309 = vmatpush.msra.mxu0 0.0
        %310 = vmatpush.msra.mxu0 0.0
        %311 = vmatpush.msra.mxu0 0.0
        %312 = vmatpush.msra.mxu0 0.0
        %313 = vmatpush.msra.mxu0 0.0
        %314 = vmatpush.msra.mxu0 0.0
        %315 = vmatpush.msra.mxu0 0.0
        %316 = vmatpush.msra.mxu0 0.0
        %317 = vmatpush.msra.mxu0 0.0
        %318 = vmatpush.msra.mxu0 0.0
        %319 = vmatpush.msra.mxu0 0.0
        %320 = vmatpush.msra.mxu0 %v303
        %321 = vmatmul.f32.gmra.mxu0 %v275
        %v322 = vpop.f32.mrf.mxu0
        %v323 = vadd.f32 0.0, %v322
        %324 = vdwg.mxu0
        %325 = vxpose.xlu0.b32.start [1/16] %v299, 128
        %326 = vxpose.xlu0.b32.cont [2/16] 0.0, 128
        %327 = vxpose.xlu0.b32.cont [3/16] 0.0, 128
        %328 = vxpose.xlu0.b32.cont [4/16] 0.0, 128
        %329 = vxpose.xlu0.b32.cont [5/16] 0.0, 128
        %330 = vxpose.xlu0.b32.cont [6/16] 0.0, 128
        %331 = vxpose.xlu0.b32.cont [7/16] 0.0, 128
        %332 = vxpose.xlu0.b32.cont [8/16] 0.0, 128
        %333 = vxpose.xlu0.b32.cont [9/16] 0.0, 128
        %334 = vxpose.xlu0.b32.cont [10/16] 0.0, 128
        %335 = vxpose.xlu0.b32.cont [11/16] 0.0, 128
        %336 = vxpose.xlu0.b32.cont [12/16] 0.0, 128
        %337 = vxpose.xlu0.b32.cont [13/16] 0.0, 128
        %338 = vxpose.xlu0.b32.cont [14/16] 0.0, 128
        %339 = vxpose.xlu0.b32.cont [15/16] 0.0, 128
        %340 = vxpose.xlu0.b32.end [16/16] 0.0, 128
        %v341 = vpop.trf.xlu0
        %v342 = vpop.trf.xlu0
        %v343 = vpop.trf.xlu0
        %v344 = vpop.trf.xlu0
        %v345 = vpop.trf.xlu0
        %v346 = vpop.trf.xlu0
        %v347 = vpop.trf.xlu0
        %v348 = vpop.trf.xlu0
        %v349 = vpop.trf.xlu0
        %v350 = vpop.trf.xlu0
        %v351 = vpop.trf.xlu0
        %v352 = vpop.trf.xlu0
        %v353 = vpop.trf.xlu0
        %v354 = vpop.trf.xlu0
        %v355 = vpop.trf.xlu0
        %v356 = vpop.trf.xlu0
        %v358 = vrot.slane %v341, 1
        %vm360 = vcmask 40960
        %361 = vst.msk [vmem:[#allocation2] sm:$0x1] %vm360, %v341
        %362 = vst.msk [vmem:[#allocation2 + $0x1] sm:$0x1] %vm360, %v358
        %363 = vxpose.xlu0.b32.start [1/16] %v323, 128
        %364 = vxpose.xlu0.b32.cont [2/16] 0.0, 128
        %365 = vxpose.xlu0.b32.cont [3/16] 0.0, 128
        %366 = vxpose.xlu0.b32.cont [4/16] 0.0, 128
        %367 = vxpose.xlu0.b32.cont [5/16] 0.0, 128
        %368 = vxpose.xlu0.b32.cont [6/16] 0.0, 128
        %369 = vxpose.xlu0.b32.cont [7/16] 0.0, 128
        %370 = vxpose.xlu0.b32.cont [8/16] 0.0, 128
        %371 = vxpose.xlu0.b32.cont [9/16] 0.0, 128
        %372 = vxpose.xlu0.b32.cont [10/16] 0.0, 128
        %373 = vxpose.xlu0.b32.cont [11/16] 0.0, 128
        %374 = vxpose.xlu0.b32.cont [12/16] 0.0, 128
        %375 = vxpose.xlu0.b32.cont [13/16] 0.0, 128
        %376 = vxpose.xlu0.b32.cont [14/16] 0.0, 128
        %377 = vxpose.xlu0.b32.cont [15/16] 0.0, 128
        %378 = vxpose.xlu0.b32.end [16/16] 0.0, 128
        %v379 = vpop.trf.xlu0
        %v380 = vpop.trf.xlu0
        %v381 = vpop.trf.xlu0
        %v382 = vpop.trf.xlu0
        %v383 = vpop.trf.xlu0
        %v384 = vpop.trf.xlu0
        %v385 = vpop.trf.xlu0
        %v386 = vpop.trf.xlu0
        %v387 = vpop.trf.xlu0
        %v388 = vpop.trf.xlu0
        %v389 = vpop.trf.xlu0
        %v390 = vpop.trf.xlu0
        %v391 = vpop.trf.xlu0
        %v392 = vpop.trf.xlu0
        %v393 = vpop.trf.xlu0
        %v394 = vpop.trf.xlu0
        %v396 = vrot.slane %v379, 1
        %398 = vxpose.xlu0.b32.start [1/16] %v379, 128
        %399 = vxpose.xlu0.b32.cont [2/16] 0.0, 128
        %400 = vxpose.xlu0.b32.cont [3/16] 0.0, 128
        %401 = vxpose.xlu0.b32.cont [4/16] 0.0, 128
        %402 = vxpose.xlu0.b32.cont [5/16] 0.0, 128
        %403 = vxpose.xlu0.b32.cont [6/16] 0.0, 128
        %404 = vxpose.xlu0.b32.cont [7/16] 0.0, 128
        %405 = vxpose.xlu0.b32.cont [8/16] 0.0, 128
        %406 = vxpose.xlu0.b32.cont [9/16] 0.0, 128
        %407 = vxpose.xlu0.b32.cont [10/16] 0.0, 128
        %408 = vxpose.xlu0.b32.cont [11/16] 0.0, 128
        %409 = vxpose.xlu0.b32.cont [12/16] 0.0, 128
        %410 = vxpose.xlu0.b32.cont [13/16] 0.0, 128
        %411 = vxpose.xlu0.b32.cont [14/16] 0.0, 128
        %412 = vxpose.xlu0.b32.cont [15/16] 0.0, 128
        %413 = vxpose.xlu0.b32.end [16/16] 0.0, 128
        %v414 = vpop.trf.xlu0
        %v415 = vpop.trf.xlu0
        %v416 = vpop.trf.xlu0
        %v417 = vpop.trf.xlu0
        %v418 = vpop.trf.xlu0
        %v419 = vpop.trf.xlu0
        %v420 = vpop.trf.xlu0
        %v421 = vpop.trf.xlu0
        %v422 = vpop.trf.xlu0
        %v423 = vpop.trf.xlu0
        %v424 = vpop.trf.xlu0
        %v425 = vpop.trf.xlu0
        %v426 = vpop.trf.xlu0
        %v427 = vpop.trf.xlu0
        %v428 = vpop.trf.xlu0
        %v429 = vpop.trf.xlu0
        %430 = vxpose.xlu0.b32.start [1/16] %v396, 128
        %431 = vxpose.xlu0.b32.cont [2/16] 0.0, 128
        %432 = vxpose.xlu0.b32.cont [3/16] 0.0, 128
        %433 = vxpose.xlu0.b32.cont [4/16] 0.0, 128
        %434 = vxpose.xlu0.b32.cont [5/16] 0.0, 128
        %435 = vxpose.xlu0.b32.cont [6/16] 0.0, 128
        %436 = vxpose.xlu0.b32.cont [7/16] 0.0, 128
        %437 = vxpose.xlu0.b32.cont [8/16] 0.0, 128
        %438 = vxpose.xlu0.b32.cont [9/16] 0.0, 128
        %439 = vxpose.xlu0.b32.cont [10/16] 0.0, 128
        %440 = vxpose.xlu0.b32.cont [11/16] 0.0, 128
        %441 = vxpose.xlu0.b32.cont [12/16] 0.0, 128
        %442 = vxpose.xlu0.b32.cont [13/16] 0.0, 128
        %443 = vxpose.xlu0.b32.cont [14/16] 0.0, 128
        %444 = vxpose.xlu0.b32.cont [15/16] 0.0, 128
        %445 = vxpose.xlu0.b32.end [16/16] 0.0, 128
        %v446 = vpop.trf.xlu0
        %v447 = vpop.trf.xlu0
        %v448 = vpop.trf.xlu0
        %v449 = vpop.trf.xlu0
        %v450 = vpop.trf.xlu0
        %v451 = vpop.trf.xlu0
        %v452 = vpop.trf.xlu0
        %v453 = vpop.trf.xlu0
        %v454 = vpop.trf.xlu0
        %v455 = vpop.trf.xlu0
        %v456 = vpop.trf.xlu0
        %v457 = vpop.trf.xlu0
        %v458 = vpop.trf.xlu0
        %v459 = vpop.trf.xlu0
        %v460 = vpop.trf.xlu0
        %v461 = vpop.trf.xlu0
        %vm462 = vcmask 5120
        %463 = vst.msk [vmem:[#allocation3] sm:$0x3f] %vm462, %v414
        %464 = vst.msk [vmem:[#allocation3 + $0x8] sm:$0x3f] %vm462, %v446
      $region48: #{tpu_custom_call.1} parent=43 // pred_fallthru
        _
      %s465 = smul.u32 %s22, 6
      %s466 = scalar_lea.vmem %s259, %s465
      %v467 = vld [vmem:[%s466] sm:$0x3f]
      %v468 = vld [vmem:[%s1] sm:$0x7]
      %vm469 = vcmask 23552
      %v471 = vsel %vm469, %v467, 0
      %vm473 = vcmask 1042432
      %v475 = vsel %vm473, %v468, 0
      %477 = vmatpush.msra.mxu0 0.0
      %478 = vmatpush.msra.mxu0 0.0
      %479 = vmatpush.msra.mxu0 0.0
      %480 = vmatpush.msra.mxu0 0.0
      %481 = vmatpush.msra.mxu0 0.0
      %482 = vmatpush.msra.mxu0 0.0
      %483 = vmatpush.msra.mxu0 0.0
      %484 = vmatpush.msra.mxu0 0.0
      %485 = vmatpush.msra.mxu0 0.0
      %486 = vmatpush.msra.mxu0 0.0
      %487 = vmatpush.msra.mxu0 0.0
      %488 = vmatpush.msra.mxu0 0.0
      %489 = vmatpush.msra.mxu0 0.0
      %490 = vmatpush.msra.mxu0 0.0
      %491 = vmatpush.msra.mxu0 0.0
      %492 = vmatpush.msra.mxu0 %v475
      %493 = vmatmul.f32.gmra.mxu0 %v471
      %v494 = vpop.f32.mrf.mxu0
      %v495 = vadd.f32 0.0, %v494
      %496 = vdwg.mxu0
      %497 = vxpose.xlu0.b32.start [1/16] %v495, 128
      %498 = vxpose.xlu0.b32.cont [2/16] 0.0, 128
      %499 = vxpose.xlu0.b32.cont [3/16] 0.0, 128
      %500 = vxpose.xlu0.b32.cont [4/16] 0.0, 128
      %501 = vxpose.xlu0.b32.cont [5/16] 0.0, 128
      %502 = vxpose.xlu0.b32.cont [6/16] 0.0, 128
      %503 = vxpose.xlu0.b32.cont [7/16] 0.0, 128
      %504 = vxpose.xlu0.b32.cont [8/16] 0.0, 128
      %505 = vxpose.xlu0.b32.cont [9/16] 0.0, 128
      %506 = vxpose.xlu0.b32.cont [10/16] 0.0, 128
      %507 = vxpose.xlu0.b32.cont [11/16] 0.0, 128
      %508 = vxpose.xlu0.b32.cont [12/16] 0.0, 128
      %509 = vxpose.xlu0.b32.cont [13/16] 0.0, 128
      %510 = vxpose.xlu0.b32.cont [14/16] 0.0, 128
      %511 = vxpose.xlu0.b32.cont [15/16] 0.0, 128
      %512 = vxpose.xlu0.b32.end [16/16] 0.0, 128
      %v513 = vpop.trf.xlu0
      %v514 = vpop.trf.xlu0
      %v515 = vpop.trf.xlu0
      %v516 = vpop.trf.xlu0
      %v517 = vpop.trf.xlu0
      %v518 = vpop.trf.xlu0
      %v519 = vpop.trf.xlu0
      %v520 = vpop.trf.xlu0
      %v521 = vpop.trf.xlu0
      %v522 = vpop.trf.xlu0
      %v523 = vpop.trf.xlu0
      %v524 = vpop.trf.xlu0
      %v525 = vpop.trf.xlu0
      %v526 = vpop.trf.xlu0
      %v527 = vpop.trf.xlu0
      %v528 = vpop.trf.xlu0
      %v530 = vrot.slane %v513, 1
      %532 = vxpose.xlu0.b32.start [1/16] %v513, 128
      %533 = vxpose.xlu0.b32.cont [2/16] 0.0, 128
      %534 = vxpose.xlu0.b32.cont [3/16] 0.0, 128
      %535 = vxpose.xlu0.b32.cont [4/16] 0.0, 128
      %536 = vxpose.xlu0.b32.cont [5/16] 0.0, 128
      %537 = vxpose.xlu0.b32.cont [6/16] 0.0, 128
      %538 = vxpose.xlu0.b32.cont [7/16] 0.0, 128
      %539 = vxpose.xlu0.b32.cont [8/16] 0.0, 128
      %540 = vxpose.xlu0.b32.cont [9/16] 0.0, 128
      %541 = vxpose.xlu0.b32.cont [10/16] 0.0, 128
      %542 = vxpose.xlu0.b32.cont [11/16] 0.0, 128
      %543 = vxpose.xlu0.b32.cont [12/16] 0.0, 128
      %544 = vxpose.xlu0.b32.cont [13/16] 0.0, 128
      %545 = vxpose.xlu0.b32.cont [14/16] 0.0, 128
      %546 = vxpose.xlu0.b32.cont [15/16] 0.0, 128
      %547 = vxpose.xlu0.b32.end [16/16] 0.0, 128
      %v548 = vpop.trf.xlu0
      %v549 = vpop.trf.xlu0
      %v550 = vpop.trf.xlu0
      %v551 = vpop.trf.xlu0
      %v552 = vpop.trf.xlu0
      %v553 = vpop.trf.xlu0
      %v554 = vpop.trf.xlu0
      %v555 = vpop.trf.xlu0
      %v556 = vpop.trf.xlu0
      %v557 = vpop.trf.xlu0
      %v558 = vpop.trf.xlu0
      %v559 = vpop.trf.xlu0
      %v560 = vpop.trf.xlu0
      %v561 = vpop.trf.xlu0
      %v562 = vpop.trf.xlu0
      %v563 = vpop.trf.xlu0
      %564 = vxpose.xlu0.b32.start [1/16] %v530, 128
      %565 = vxpose.xlu0.b32.cont [2/16] 0.0, 128
      %566 = vxpose.xlu0.b32.cont [3/16] 0.0, 128
      %567 = vxpose.xlu0.b32.cont [4/16] 0.0, 128
      %568 = vxpose.xlu0.b32.cont [5/16] 0.0, 128
      %569 = vxpose.xlu0.b32.cont [6/16] 0.0, 128
      %570 = vxpose.xlu0.b32.cont [7/16] 0.0, 128
      %571 = vxpose.xlu0.b32.cont [8/16] 0.0, 128
      %572 = vxpose.xlu0.b32.cont [9/16] 0.0, 128
      %573 = vxpose.xlu0.b32.cont [10/16] 0.0, 128
      %574 = vxpose.xlu0.b32.cont [11/16] 0.0, 128
      %575 = vxpose.xlu0.b32.cont [12/16] 0.0, 128
      %576 = vxpose.xlu0.b32.cont [13/16] 0.0, 128
      %577 = vxpose.xlu0.b32.cont [14/16] 0.0, 128
      %578 = vxpose.xlu0.b32.cont [15/16] 0.0, 128
      %579 = vxpose.xlu0.b32.end [16/16] 0.0, 128
      %v580 = vpop.trf.xlu0
      %v581 = vpop.trf.xlu0
      %v582 = vpop.trf.xlu0
      %v583 = vpop.trf.xlu0
      %v584 = vpop.trf.xlu0
      %v585 = vpop.trf.xlu0
      %v586 = vpop.trf.xlu0
      %v587 = vpop.trf.xlu0
      %v588 = vpop.trf.xlu0
      %v589 = vpop.trf.xlu0
      %v590 = vpop.trf.xlu0
      %v591 = vpop.trf.xlu0
      %v592 = vpop.trf.xlu0
      %v593 = vpop.trf.xlu0
      %v594 = vpop.trf.xlu0
      %v595 = vpop.trf.xlu0
      %vm596 = vcmask 5120
      %597 = vst.msk [vmem:[#allocation4] sm:$0x3f] %vm596, -1e+30
      %598 = vst.msk [vmem:[#allocation4 + $0x8] sm:$0x3f] %vm596, -1e+30
      %599 = vst.msk [vmem:[#allocation5] sm:$0x3f] %vm596, 0.0
      %600 = vst.msk [vmem:[#allocation5 + $0x8] sm:$0x3f] %vm596, 0.0
      %601 = vst.msk [vmem:[#allocation6] sm:$0x3f] %vm596, 0.0
      %602 = vst.msk [vmem:[#allocation6 + $0x8] sm:$0x3f] %vm596, 0.0
      %v603 = vld [vmem:[#allocation2] sm:$0x1]
      %v604 = vld [vmem:[#allocation2 + $0x1] sm:$0x1]
      %v605 = vld [vmem:[#allocation3] sm:$0x3f]
      %v606 = vld [vmem:[#allocation3 + $0x8] sm:$0x3f]
      %vm607 = vcmask 7168
      %v609 = vsel %vm607, %v548, 0
      %vm611 = vcmask 1040384
      %v613 = vsel %vm611, %v603, 0
      %615 = vmatpush.msra.mxu0 0.0
      %616 = vmatpush.msra.mxu0 0.0
      %617 = vmatpush.msra.mxu0 0.0
      %618 = vmatpush.msra.mxu0 0.0
      %619 = vmatpush.msra.mxu0 0.0
      %620 = vmatpush.msra.mxu0 0.0
      %621 = vmatpush.msra.mxu0 0.0
      %622 = vmatpush.msra.mxu0 0.0
      %623 = vmatpush.msra.mxu0 0.0
      %624 = vmatpush.msra.mxu0 0.0
      %625 = vmatpush.msra.mxu0 0.0
      %626 = vmatpush.msra.mxu0 0.0
      %627 = vmatpush.msra.mxu0 0.0
      %628 = vmatpush.msra.mxu0 0.0
      %629 = vmatpush.msra.mxu0 0.0
      %630 = vmatpush.msra.mxu0 %v613
      %631 = vmatmul.f32.gmra.mxu0 %v609
      %v632 = vpop.f32.mrf.mxu0
      %v633 = vadd.f32 0.0, %v632
      %634 = vdwg.mxu0
      %v636 = vsel %vm607, %v580, 0
      %v639 = vsel %vm611, %v604, 0
      %641 = vmatpush.msra.mxu0 0.0
      %642 = vmatpush.msra.mxu0 0.0
      %643 = vmatpush.msra.mxu0 0.0
      %644 = vmatpush.msra.mxu0 0.0
      %645 = vmatpush.msra.mxu0 0.0
      %646 = vmatpush.msra.mxu0 0.0
      %647 = vmatpush.msra.mxu0 0.0
      %648 = vmatpush.msra.mxu0 0.0
      %649 = vmatpush.msra.mxu0 0.0
      %650 = vmatpush.msra.mxu0 0.0
      %651 = vmatpush.msra.mxu0 0.0
      %652 = vmatpush.msra.mxu0 0.0
      %653 = vmatpush.msra.mxu0 0.0
      %654 = vmatpush.msra.mxu0 0.0
      %655 = vmatpush.msra.mxu0 0.0
      %656 = vmatpush.msra.mxu0 %v639
      %657 = vmatmul.f32.gmra.mxu0 %v636
      %v658 = vpop.f32.mrf.mxu0
      %v659 = vadd.f32 0.0, %v658
      %660 = vdwg.mxu0
      %v661 = vlaneseq
      %v662 = vshrl.u32 %v661, 7
      %v663 = vstv %s465
      %v664 = vadd.s32 %v663, %v662
      %v665 = vlaneseq
      %v666 = vand.u32 %v665, 127
      %vm667 = vcmp.gt.s32.totalorder %v666, %v664
      %v668 = vsel %vm667, 1, 0
      %vm669 = vcmp.eq.s32.totalorder %v668, 1
      %v670 = vsel %vm669, -1e+30, %v633
      %v671 = vsel %vm669, -1e+30, %v659
      %v672 = vld [vmem:[#allocation4] sm:$0x3f]
      %v673 = vld [vmem:[#allocation4 + $0x8] sm:$0x3f]
      %vm674 = vcmask 46080
      %v675 = vsel %vm674, %v670, -inf
      %676 = vmax.xlane.f32.xlu0 %v675
      %v677 = vpop.xlane.xlu0 %676
      %v678 = vsel %vm674, %v671, -inf
      %679 = vmax.xlane.f32.xlu0 %v678
      %v680 = vpop.xlane.xlu0 %679
      %v681 = vmax.f32 %v672, %v677
      %v682 = vmax.f32 %v673, %v680
      %v683 = vsub.f32 %v672, %v681
      %v684 = vsub.f32 %v673, %v682
      %v685 = vmul.f32 %v683, 1.442695
      %v686 = vpow.pop %v685
      %v687 = vmul.f32 %v684, 1.442695
      %v688 = vpow.pop %v687
      %690 = vset.pattern.permute.xlu0 0
      %691 = vperm.xlu0 %690, %v681
      %v692 = vpop.permute.xlu0 %691
      %695 = vset.pattern.permute.xlu0 0
      %696 = vperm.xlu0 %695, %v682
      %v697 = vpop.permute.xlu0 %696
      %v699 = vsub.f32 %v670, %v692
      %v700 = vsub.f32 %v671, %v697
      %v701 = vmul.f32 %v699, 1.442695
      %v702 = vpow.pop %v701
      %v703 = vmul.f32 %v700, 1.442695
      %v704 = vpow.pop %v703
      %v705 = vld [vmem:[#allocation5] sm:$0x3f]
      %v706 = vld [vmem:[#allocation5 + $0x8] sm:$0x3f]
      %v707 = vmul.f32 %v686, %v705
      %v708 = vmul.f32 %v688, %v706
      %v709 = vsel %vm674, %v702, 0.0
      %710 = vadd.xlane.f32.xlu0 %v709
      %v711 = vpop.xlane.xlu0 %710
      %v712 = vsel %vm674, %v704, 0.0
      %713 = vadd.xlane.f32.xlu0 %v712
      %v714 = vpop.xlane.xlu0 %713
      %v715 = vadd.f32 %v707, %v711
      %v716 = vadd.f32 %v708, %v714
      %717 = vst.msk [vmem:[#allocation5] sm:$0x3f] %vm596, %v715
      %718 = vst.msk [vmem:[#allocation5 + $0x8] sm:$0x3f] %vm596, %v716
      %v719 = vld [vmem:[#allocation6] sm:$0x3f]
      %v720 = vld [vmem:[#allocation6 + $0x8] sm:$0x3f]
      %v721 = vmul.f32 %v686, %v719
      %v722 = vmul.f32 %v688, %v720
      %vm723 = vcmask 48128
      %v725 = vsel %vm723, %v702, 0
      %vm727 = vcmask 1045504
      %v729 = vsel %vm727, %v605, 0
      %731 = vmatpush.msra.mxu0 0.0
      %732 = vmatpush.msra.mxu0 0.0
      %733 = vmatpush.msra.mxu0 0.0
      %734 = vmatpush.msra.mxu0 0.0
      %735 = vmatpush.msra.mxu0 0.0
      %736 = vmatpush.msra.mxu0 0.0
      %737 = vmatpush.msra.mxu0 0.0
      %738 = vmatpush.msra.mxu0 0.0
      %739 = vmatpush.msra.mxu0 0.0
      %740 = vmatpush.msra.mxu0 0.0
      %741 = vmatpush.msra.mxu0 0.0
      %742 = vmatpush.msra.mxu0 0.0
      %743 = vmatpush.msra.mxu0 0.0
      %744 = vmatpush.msra.mxu0 0.0
      %745 = vmatpush.msra.mxu0 0.0
      %746 = vmatpush.msra.mxu0 %v729
      %747 = vmatmul.f32.gmra.mxu0 %v725
      %v748 = vpop.f32.mrf.mxu0
      %v749 = vadd.f32 0.0, %v748
      %750 = vdwg.mxu0
      %v752 = vsel %vm723, %v704, 0
      %v755 = vsel %vm727, %v606, 0
      %757 = vmatpush.msra.mxu0 0.0
      %758 = vmatpush.msra.mxu0 0.0
      %759 = vmatpush.msra.mxu0 0.0
      %760 = vmatpush.msra.mxu0 0.0
      %761 = vmatpush.msra.mxu0 0.0
      %762 = vmatpush.msra.mxu0 0.0
      %763 = vmatpush.msra.mxu0 0.0
      %764 = vmatpush.msra.mxu0 0.0
      %765 = vmatpush.msra.mxu0 0.0
      %766 = vmatpush.msra.mxu0 0.0
      %767 = vmatpush.msra.mxu0 0.0
      %768 = vmatpush.msra.mxu0 0.0
      %769 = vmatpush.msra.mxu0 0.0
      %770 = vmatpush.msra.mxu0 0.0
      %771 = vmatpush.msra.mxu0 0.0
      %772 = vmatpush.msra.mxu0 %v755
      %773 = vmatmul.f32.gmra.mxu0 %v752
      %v774 = vpop.f32.mrf.mxu0
      %v775 = vadd.f32 0.0, %v774
      %776 = vdwg.mxu0
      %v777 = vadd.f32 %v721, %v749
      %v778 = vadd.f32 %v722, %v775
      %779 = vst.msk [vmem:[#allocation6] sm:$0x3f] %vm596, %v777
      %780 = vst.msk [vmem:[#allocation6 + $0x8] sm:$0x3f] %vm596, %v778
      %781 = vst.msk [vmem:[#allocation4] sm:$0x3f] %vm596, %v681
      %782 = vst.msk [vmem:[#allocation4 + $0x8] sm:$0x3f] %vm596, %v682
      %v783 = vld [vmem:[#allocation6] sm:$0x3f]
      %v784 = vld [vmem:[#allocation6 + $0x8] sm:$0x3f]
      %v785 = vld [vmem:[#allocation5] sm:$0x3f]
      %v786 = vld [vmem:[#allocation5 + $0x8] sm:$0x3f]
      %v787 = vrcp.pop %v785
      %v788 = vrcp.pop %v786
      %v789 = vmul.f32 %v783, %v787
      %v790 = vmul.f32 %v784, %v788
      %v791 = vld [vmem:[%s4] sm:$0x1]
      %v792 = vld [vmem:[%s4 + $0x1] sm:$0x1]
      %v794 = vsel %vm607, %v789, 0
      %v797 = vsel %vm611, %v791, 0
      %799 = vmatpush.msra.mxu0 0.0
      %800 = vmatpush.msra.mxu0 0.0
      %801 = vmatpush.msra.mxu0 0.0
      %802 = vmatpush.msra.mxu0 0.0
      %803 = vmatpush.msra.mxu0 0.0
      %804 = vmatpush.msra.mxu0 0.0
      %805 = vmatpush.msra.mxu0 0.0
      %806 = vmatpush.msra.mxu0 0.0
      %807 = vmatpush.msra.mxu0 0.0
      %808 = vmatpush.msra.mxu0 0.0
      %809 = vmatpush.msra.mxu0 0.0
      %810 = vmatpush.msra.mxu0 0.0
      %811 = vmatpush.msra.mxu0 0.0
      %812 = vmatpush.msra.mxu0 0.0
      %813 = vmatpush.msra.mxu0 0.0
      %814 = vmatpush.msra.mxu0 %v797
      %815 = vmatmul.f32.gmra.mxu0 %v794
      %v816 = vpop.f32.mrf.mxu0
      %v817 = vadd.f32 0.0, %v816
      %818 = vdwg.mxu0
      %v820 = vsel %vm607, %v790, 0
      %v823 = vsel %vm611, %v792, 0
      %825 = vmatpush.msra.mxu0 0.0
      %826 = vmatpush.msra.mxu0 0.0
      %827 = vmatpush.msra.mxu0 0.0
      %828 = vmatpush.msra.mxu0 0.0
      %829 = vmatpush.msra.mxu0 0.0
      %830 = vmatpush.msra.mxu0 0.0
      %831 = vmatpush.msra.mxu0 0.0
      %832 = vmatpush.msra.mxu0 0.0
      %833 = vmatpush.msra.mxu0 0.0
      %834 = vmatpush.msra.mxu0 0.0
      %835 = vmatpush.msra.mxu0 0.0
      %836 = vmatpush.msra.mxu0 0.0
      %837 = vmatpush.msra.mxu0 0.0
      %838 = vmatpush.msra.mxu0 0.0
      %839 = vmatpush.msra.mxu0 0.0
      %840 = vmatpush.msra.mxu0 %v823
      %841 = vmatmul.f32.gmra.mxu0 %v820
      %v842 = vpop.f32.mrf.mxu0
      %v843 = vadd.f32 0.0, %v842
      %844 = vdwg.mxu0
      %vm845 = vcmask 13312
      %v846 = vsel %vm845, %v817, 0.0
      %v847 = vsel %vm845, %v843, 0.0
      %v848 = vadd.f32 %v846, %v847
      %v849 = vld [vmem:[%s5] sm:$0x1]
      %v851 = vperm.slane %v849, 0
      %v853 = vadd.f32 %v848, %v851
      %854 = vst.msk [vmem:[%s266] sm:$0x3f] %vm845, %v853
      %p855 = scmp.lt.s32.totalorder %s21, 1
      %s856 = scalar_select %p855, %s21, 1
      %p857 = scmp.lt.s32.totalorder %s22, 0
      %s858 = scalar_select %p857, %s22, 0
      %s859 = sadd.s32 %s858, %s856
      %s860 = smul.addr %s859, 8
      %s861 = scalar_lea.vmem %s6, %s860
      // Predicated region
      $region49: #{tpu_custom_call.1} parent=43 // pred_check
        %p862 = pneg %p180
      $region50: #{tpu_custom_call.1} parent=43 // pred_check_branch
        %864 = sbr.rel (%p862) target = $region52
      $region51: #{tpu_custom_call.1} parent=43 // pred_region
        _
      $region52: #{tpu_custom_call.1} parent=43 // pred_fallthru
        _
    $region44: #{tpu_custom_call.1} parent=5 // pred_fallthru
      _
    %p865 = scmp.le.s32.totalorder 2, %s12
    // Predicated region
    $region53: #{tpu_custom_call.1} parent=5 // pred_check
      %p866 = pneg %p865
    $region54: #{tpu_custom_call.1} parent=5 // pred_check_branch
      %868 = sbr.rel (%p866) target = $region56
    $region55: #{tpu_custom_call.1} parent=5 // pred_region
      %s869 = ssub.s32 %s12, 2
      // Predicated region
      $region57: #{tpu_custom_call.1} parent=55 // pred_check
        %p870 = pneg %p186
      $region58: #{tpu_custom_call.1} parent=55 // pred_check_branch
        %872 = sbr.rel (%p870) target = $region60
      $region59: #{tpu_custom_call.1} parent=55 // pred_region
        %p873 = scmp.lt.s32.totalorder %s23, 1
        %s874 = scalar_select %p873, %s23, 1
        %p875 = scmp.lt.s32.totalorder %s24, 0
        %s876 = scalar_select %p875, %s24, 0
        %s877 = sadd.s32 %s876, %s874
        %s878 = smul.addr %s877, 8
        %s879 = scalar_lea.vmem %s6, %s878
      $region60: #{tpu_custom_call.1} parent=55 // pred_fallthru
        _
    $region56: #{tpu_custom_call.1} parent=5 // pred_fallthru
      _
  $region6: #{tpu_custom_call.1} parent=0 // loop_footer
    %s16 = sadd.s32 1, %s12
  $region7: #{tpu_custom_call.1} parent=0 // loop_footer_branch
    %11 = sbr.rel target = $region3
  $region8: #{tpu_custom_call.1} parent=0 // loop_exit
    _

// kernel: tpu_custom_call.1
$region0: #{tpu_custom_call.1}
  #allocation0 [shape = 'u32[]', space=smem, size = 0x4, offset = 0x4, fixed_abs, tag = 'smem constant byte address 0x4 - core index']
  #allocation1 [shape = 'u32[72,128]{1,0:T(1,128)}', space=vmem, size = 0x9000, scoped, tag = 'internal scratch']
  #allocation2 [shape = 'f32[1,2,1,6]{3,2,1,0:T(1,128)}', space=vmem, size = 0x400, scoped, tag = 'scratch operand']
  #allocation3 [shape = 'f32[1,2,6,1]{3,2,1,0:T(8,128)}', space=vmem, size = 0x2000, scoped, tag = 'scratch operand']
  #allocation4 [shape = 'f32[2,6,1]{2,1,0:T(8,128)}', space=vmem, size = 0x2000, scoped, tag = 'scratch operand']
  #allocation5 [shape = 'f32[2,6,1]{2,1,0:T(8,128)}', space=vmem, size = 0x2000, scoped, tag = 'scratch operand']
  #allocation6 [shape = 'f32[2,6,1]{2,1,0:T(8,128)}', space=vmem, size = 0x2000, scoped, tag = 'scratch operand']
  %s0 = inlined_call_operand.vmem [shape: f32[2,6,3], index: 0, kind: input, shape index: {}]
  %s1 = inlined_call_operand.vmem [shape: f32[3,2], index: 1, kind: input, shape index: {}]
  %s2 = inlined_call_operand.vmem [shape: f32[3,2], index: 2, kind: input, shape index: {}]
  %s3 = inlined_call_operand.vmem [shape: f32[3,2], index: 3, kind: input, shape index: {}]
  %s4 = inlined_call_operand.vmem [shape: f32[2,1,2], index: 4, kind: input, shape index: {}]
  %s5 = inlined_call_operand.vmem [shape: f32[1,2], index: 5, kind: input, shape index: {}]
  %s6 = inlined_call_operand.vmem [shape: f32[2,6,2], index: 6, kind: output, shape index: {}]
  %s7 = sld [smem:[#allocation0]]
  $region61: #{tpu_custom_call.1} parent=0
    _
  %s9 = ssub.s32 1, %s7
  %s10 = scalar_select 0, %s9, %s7
  loop: start=0, step=1, limit=4
  $region2: #{tpu_custom_call.1} parent=0 // loop_pre_header
    _
  $region3: #{tpu_custom_call.1} parent=0 // loop_header
    %s12 = sphi 0, %s16
    %p13 = scmp.ge.s32.totalorder %s12, 4
    %s19 = sphi 0, %s31
    %s20 = sphi 0, %s27
    %s21 = sphi 0, %s19
    %s22 = sphi 0, %s20
    %s23 = sphi 0, %s21
    %s24 = sphi 0, %s22
    %s34 = sphi 0, %s36
    %s37 = sphi 0, %s34
    %s38 = sphi 0, %s37
    %s54 = sphi 0, %s38
    %s58 = sphi 0, %s58
    %s60 = sphi 0, %s58
    %s61 = sphi 0, %s60
    %s75 = sphi 0, %s61
    %s79 = sphi 0, %s79
    %s81 = sphi 0, %s79
    %s82 = sphi 0, %s81
    %s96 = sphi 0, %s82
    %s100 = sphi 0, %s100
    %s102 = sphi 0, %s100
    %s103 = sphi 0, %s102
    %s117 = sphi 0, %s103
    %s121 = sphi 0, %s121
    %s123 = sphi 0, %s121
    %s124 = sphi 0, %s123
    %s138 = sphi 0, %s124
    %s142 = sphi 0, %s142
    %s144 = sphi 0, %s142
    %s145 = sphi 0, %s144
    %s159 = sphi 0, %s145
    %s167 = sphi 0, %s169
    %s170 = sphi 0, %s167
    %s171 = sphi 0, %s170
    %s187 = sphi 0, %s171
  $region4: #{tpu_custom_call.1} parent=0 // loop_header_branch
    %15 = sbr.rel (%p13) target = $region8
  $region5: #{tpu_custom_call.1} parent=0 // loop_body
    %s17 = ssub.s32 %s12, 1
    %s18 = ssub.s32 %s12, 2
    %s25 = sadd.s32 1, %s20
    %p26 = scmp.ge.s32.totalorder %s25, 1
    %s27 = scalar_select %p26, 0, %s25
    %s28 = sadd.s32 1, %s19
    %s29 = scalar_select %p26, %s28, %s19
    %p30 = scmp.ge.s32.totalorder %s29, 2
    %s31 = scalar_select %p30, 0, %s29
    %s32 = ssub.s32 %s19, %s31
    %p33 = scmp.eq.s32.totalorder %s32, 0
    %s35 = sadd.s32 %s34, 1
    %s36 = scalar_select %p33, %s34, %s35
    %p39 = pneg %p33
    %p40 = scmp.eq.s32.totalorder %s12, 1
    %p41 = por %p39, %p40
    %p42 = scmp.ne.s32.totalorder %s34, %s37
    %p43 = scmp.eq.s32.totalorder %s12, 0
    %p44 = por %p42, %p43
    %p45 = scmp.ne.s32.totalorder %s34, %s37
    %p46 = scmp.eq.s32.totalorder %s17, 1
    %p47 = por %p45, %p46
    %p48 = scmp.ne.s32.totalorder %s37, %s38
    %p49 = scmp.eq.s32.totalorder %s17, 0
    %p50 = por %p48, %p49
    %p51 = scmp.ne.s32.totalorder %s37, %s38
    %p52 = scmp.eq.s32.totalorder %s18, 1
    %p53 = por %p51, %p52
    %p55 = scmp.ne.s32.totalorder %s38, %s54
    %p56 = scmp.eq.s32.totalorder %s18, 0
    %p57 = por %p55, %p56
    %s59 = sadd.s32 %s58, 1
    %p62 = scmp.eq.s32.totalorder %s12, 1
    %p63 = scmp.ne.s32.totalorder %s58, %s60
    %p64 = scmp.eq.s32.totalorder %s12, 0
    %p65 = por %p63, %p64
    %p66 = scmp.ne.s32.totalorder %s58, %s60
    %p67 = scmp.eq.s32.totalorder %s17, 1
    %p68 = por %p66, %p67
    %p69 = scmp.ne.s32.totalorder %s60, %s61
    %p70 = scmp.eq.s32.totalorder %s17, 0
    %p71 = por %p69, %p70
    %p72 = scmp.ne.s32.totalorder %s60, %s61
    %p73 = scmp.eq.s32.totalorder %s18, 1
    %p74 = por %p72, %p73
    %p76 = scmp.ne.s32.totalorder %s61, %s75
    %p77 = scmp.eq.s32.totalorder %s18, 0
    %p78 = por %p76, %p77
    %s80 = sadd.s32 %s79, 1
    %p83 = scmp.eq.s32.totalorder %s12, 1
    %p84 = scmp.ne.s32.totalorder %s79, %s81
    %p85 = scmp.eq.s32.totalorder %s12, 0
    %p86 = por %p84, %p85
    %p87 = scmp.ne.s32.totalorder %s79, %s81
    %p88 = scmp.eq.s32.totalorder %s17, 1
    %p89 = por %p87, %p88
    %p90 = scmp.ne.s32.totalorder %s81, %s82
    %p91 = scmp.eq.s32.totalorder %s17, 0
    %p92 = por %p90, %p91
    %p93 = scmp.ne.s32.totalorder %s81, %s82
    %p94 = scmp.eq.s32.totalorder %s18, 1
    %p95 = por %p93, %p94
    %p97 = scmp.ne.s32.totalorder %s82, %s96
    %p98 = scmp.eq.s32.totalorder %s18, 0
    %p99 = por %p97, %p98
    %s101 = sadd.s32 %s100, 1
    %p104 = scmp.eq.s32.totalorder %s12, 1
    %p105 = scmp.ne.s32.totalorder %s100, %s102
    %p106 = scmp.eq.s32.totalorder %s12, 0
    %p107 = por %p105, %p106
    %p108 = scmp.ne.s32.totalorder %s100, %s102
    %p109 = scmp.eq.s32.totalorder %s17, 1
    %p110 = por %p108, %p109
    %p111 = scmp.ne.s32.totalorder %s102, %s103
    %p112 = scmp.eq.s32.totalorder %s17, 0
    %p113 = por %p111, %p112
    %p114 = scmp.ne.s32.totalorder %s102, %s103
    %p115 = scmp.eq.s32.totalorder %s18, 1
    %p116 = por %p114, %p115
    %p118 = scmp.ne.s32.totalorder %s103, %s117
    %p119 = scmp.eq.s32.totalorder %s18, 0
    %p120 = por %p118, %p119
    %s122 = sadd.s32 %s121, 1
    %p125 = scmp.eq.s32.totalorder %s12, 1
    %p126 = scmp.ne.s32.totalorder %s121, %s123
    %p127 = scmp.eq.s32.totalorder %s12, 0
    %p128 = por %p126, %p127
    %p129 = scmp.ne.s32.totalorder %s121, %s123
    %p130 = scmp.eq.s32.totalorder %s17, 1
    %p131 = por %p129, %p130
    %p132 = scmp.ne.s32.totalorder %s123, %s124
    %p133 = scmp.eq.s32.totalorder %s17, 0
    %p134 = por %p132, %p133
    %p135 = scmp.ne.s32.totalorder %s123, %s124
    %p136 = scmp.eq.s32.totalorder %s18, 1
    %p137 = por %p135, %p136
    %p139 = scmp.ne.s32.totalorder %s124, %s138
    %p140 = scmp.eq.s32.totalorder %s18, 0
    %p141 = por %p139, %p140
    %s143 = sadd.s32 %s142, 1
    %p146 = scmp.eq.s32.totalorder %s12, 1
    %p147 = scmp.ne.s32.totalorder %s142, %s144
    %p148 = scmp.eq.s32.totalorder %s12, 0
    %p149 = por %p147, %p148
    %p150 = scmp.ne.s32.totalorder %s142, %s144
    %p151 = scmp.eq.s32.totalorder %s17, 1
    %p152 = por %p150, %p151
    %p153 = scmp.ne.s32.totalorder %s144, %s145
    %p154 = scmp.eq.s32.totalorder %s17, 0
    %p155 = por %p153, %p154
    %p156 = scmp.ne.s32.totalorder %s144, %s145
    %p157 = scmp.eq.s32.totalorder %s18, 1
    %p158 = por %p156, %p157
    %p160 = scmp.ne.s32.totalorder %s145, %s159
    %p161 = scmp.eq.s32.totalorder %s18, 0
    %p162 = por %p160, %p161
    %s163 = ssub.s32 %s19, %s31
    %s164 = ssub.s32 %s20, %s27
    %s165 = sor.u32 %s163, %s164
    %p166 = scmp.eq.s32.totalorder %s165, 0
    %s168 = sadd.s32 %s167, 1
    %s169 = scalar_select %p166, %s167, %s168
    %p172 = pneg %p166
    %p173 = scmp.eq.s32.totalorder %s12, 1
    %p174 = por %p172, %p173
    %p175 = scmp.ne.s32.totalorder %s167, %s170
    %p176 = scmp.eq.s32.totalorder %s12, 0
    %p177 = por %p175, %p176
    %p178 = scmp.ne.s32.totalorder %s167, %s170
    %p179 = scmp.eq.s32.totalorder %s17, 1
    %p180 = por %p178, %p179
    %p181 = scmp.ne.s32.totalorder %s170, %s171
    %p182 = scmp.eq.s32.totalorder %s17, 0
    %p183 = por %p181, %p182
    %p184 = scmp.ne.s32.totalorder %s170, %s171
    %p185 = scmp.eq.s32.totalorder %s18, 1
    %p186 = por %p184, %p185
    %p188 = scmp.ne.s32.totalorder %s171, %s187
    %p189 = scmp.eq.s32.totalorder %s18, 0
    %p190 = por %p188, %p189
    %p191 = scmp.le.s32.totalorder 1, %s12
    %p192 = scmp.lt.s32.totalorder %s12, 3
    %p193 = pnand %p191, %p192
    %p194 = pneg %p193
    // Predicated region
    $region9: #{tpu_custom_call.1} parent=5 // pred_check
      _
    $region10: #{tpu_custom_call.1} parent=5 // pred_check_branch
      %196 = sbr.rel (%p193) target = $region12
    $region11: #{tpu_custom_call.1} parent=5 // pred_region
      %s197 = ssub.s32 %s12, 1
      // Predicated region
      $region13: #{tpu_custom_call.1} parent=11 // pred_check
        %p198 = pneg %p71
      $region14: #{tpu_custom_call.1} parent=11 // pred_check_branch
        %200 = sbr.rel (%p198) target = $region16
      $region15: #{tpu_custom_call.1} parent=11 // pred_region
        _
      $region16: #{tpu_custom_call.1} parent=11 // pred_fallthru
        _
      // Predicated region
      $region17: #{tpu_custom_call.1} parent=11 // pred_check
        %p201 = pneg %p92
      $region18: #{tpu_custom_call.1} parent=11 // pred_check_branch
        %203 = sbr.rel (%p201) target = $region20
      $region19: #{tpu_custom_call.1} parent=11 // pred_region
        _
      $region20: #{tpu_custom_call.1} parent=11 // pred_fallthru
        _
      // Predicated region
      $region21: #{tpu_custom_call.1} parent=11 // pred_check
        %p204 = pneg %p113
      $region22: #{tpu_custom_call.1} parent=11 // pred_check_branch
        %206 = sbr.rel (%p204) target = $region24
      $region23: #{tpu_custom_call.1} parent=11 // pred_region
        _
      $region24: #{tpu_custom_call.1} parent=11 // pred_fallthru
        _
      // Predicated region
      $region25: #{tpu_custom_call.1} parent=11 // pred_check
        %p207 = pneg %p134
      $region26: #{tpu_custom_call.1} parent=11 // pred_check_branch
        %209 = sbr.rel (%p207) target = $region28
      $region27: #{tpu_custom_call.1} parent=11 // pred_region
        _
      $region28: #{tpu_custom_call.1} parent=11 // pred_fallthru
        _
      // Predicated region
      $region29: #{tpu_custom_call.1} parent=11 // pred_check
        %p210 = pneg %p155
      $region30: #{tpu_custom_call.1} parent=11 // pred_check_branch
        %212 = sbr.rel (%p210) target = $region32
      $region31: #{tpu_custom_call.1} parent=11 // pred_region
        _
      $region32: #{tpu_custom_call.1} parent=11 // pred_fallthru
        _
    $region12: #{tpu_custom_call.1} parent=5 // pred_fallthru
      _
    %p213 = scmp.lt.s32.totalorder %s12, 2
    // Predicated region
    $region33: #{tpu_custom_call.1} parent=5 // pred_check
      %p214 = pneg %p213
    $region34: #{tpu_custom_call.1} parent=5 // pred_check_branch
      %216 = sbr.rel (%p214) target = $region36
    $region35: #{tpu_custom_call.1} parent=5 // pred_region
      // Predicated region
      $region37: #{tpu_custom_call.1} parent=35 // pred_check
        %p217 = pneg %p44
      $region38: #{tpu_custom_call.1} parent=35 // pred_check_branch
        %219 = sbr.rel (%p217) target = $region40
      $region39: #{tpu_custom_call.1} parent=35 // pred_region
        %p220 = scmp.lt.s32.totalorder %s19, 1
        %s221 = scalar_select %p220, %s19, 1
        %s222 = smul.addr %s221, 8
        %s223 = scalar_lea.vmem %s0, %s222
      $region40: #{tpu_custom_call.1} parent=35 // pred_fallthru
        _
    $region36: #{tpu_custom_call.1} parent=5 // pred_fallthru
      _
    %p224 = scmp.le.s32.totalorder 1, %s12
    %p225 = scmp.lt.s32.totalorder %s12, 3
    %p226 = pnand %p224, %p225
    %p227 = pneg %p226
    // Predicated region
    $region41: #{tpu_custom_call.1} parent=5 // pred_check
      _
    $region42: #{tpu_custom_call.1} parent=5 // pred_check_branch
      %229 = sbr.rel (%p226) target = $region44
    $region43: #{tpu_custom_call.1} parent=5 // pred_region
      %s230 = ssub.s32 %s12, 1
      %p231 = scmp.lt.s32.totalorder %s21, 1
      %s232 = scalar_select %p231, %s21, 1
      %s233 = smul.addr %s232, 8
      %s234 = scalar_lea.vmem %s0, %s233
      %p235 = pneg %p50
      %p236 = pneg %p47
      %p237 = pneg %p71
      %p238 = pneg %p68
      %p239 = pneg %p92
      %p240 = pneg %p89
      %p241 = pneg %p113
      %p242 = pneg %p110
      %p243 = pneg %p134
      %p244 = pneg %p131
      %p245 = pneg %p155
      %p246 = pneg %p152
      %p247 = pneg %p183
      %p248 = pneg %p180
      %p249 = scmp.lt.s32.totalorder %s21, 1
      %s250 = scalar_select %p249, %s21, 1
      %p251 = scmp.lt.s32.totalorder %s22, 0
      %s252 = scalar_select %p251, %s22, 0
      %s253 = sadd.s32 %s252, %s250
      %s254 = smul.addr %s253, 8
      %s255 = scalar_lea.vmem %s6, %s254
      %p256 = scmp.lt.s32.totalorder %s21, 1
      %s257 = scalar_select %p256, %s21, 1
      %s258 = smul.addr %s257, 8
      %s259 = scalar_lea.vmem %s0, %s258
      %p260 = scmp.lt.s32.totalorder %s21, 1
      %s261 = scalar_select %p260, %s21, 1
      %p262 = scmp.lt.s32.totalorder %s22, 0
      %s263 = scalar_select %p262, %s22, 0
      %s264 = sadd.s32 %s263, %s261
      %s265 = smul.addr %s264, 8
      %s266 = scalar_lea.vmem %s6, %s265
      %p267 = scmp.eq.s32.totalorder %s22, 0
      // Predicated region
      $region45: #{tpu_custom_call.1} parent=43 // pred_check
        %p268 = pneg %p267
      $region46: #{tpu_custom_call.1} parent=43 // pred_check_branch
        %270 = sbr.rel (%p268) target = $region48
      $region47: #{tpu_custom_call.1} parent=43 // pred_region
        %v271 = vld [vmem:[%s259] sm:$0x3f]
        %v272 = vld [vmem:[%s2] sm:$0x7]
        %vm273 = vcmask 23552
        %v275 = vsel %vm273, %v271, 0
        %vm277 = vcmask 1042432
        %v279 = vsel %vm277, %v272, 0
        %281 = vmatpush.msra.mxu0 0.0
        %282 = vmatpush.msra.mxu0 0.0
        %283 = vmatpush.msra.mxu0 0.0
        %284 = vmatpush.msra.mxu0 0.0
        %285 = vmatpush.msra.mxu0 0.0
        %286 = vmatpush.msra.mxu0 0.0
        %287 = vmatpush.msra.mxu0 0.0
        %288 = vmatpush.msra.mxu0 0.0
        %289 = vmatpush.msra.mxu0 0.0
        %290 = vmatpush.msra.mxu0 0.0
        %291 = vmatpush.msra.mxu0 0.0
        %292 = vmatpush.msra.mxu0 0.0
        %293 = vmatpush.msra.mxu0 0.0
        %294 = vmatpush.msra.mxu0 0.0
        %295 = vmatpush.msra.mxu0 0.0
        %296 = vmatpush.msra.mxu0 %v279
        %297 = vmatmul.f32.gmra.mxu0 %v275
        %v298 = vpop.f32.mrf.mxu0
        %v299 = vadd.f32 0.0, %v298
        %300 = vdwg.mxu0
        %v301 = vld [vmem:[%s3] sm:$0x7]
        %v303 = vsel %vm277, %v301, 0
        %305 = vmatpush.msra.mxu0 0.0
        %306 = vmatpush.msra.mxu0 0.0
        %307 = vmatpush.msra.mxu0 0.0
        %308 = vmatpush.msra.mxu0 0.0
        %309 = vmatpush.msra.mxu0 0.0
        %310 = vmatpush.msra.mxu0 0.0
        %311 = vmatpush.msra.mxu0 0.0
        %312 = vmatpush.msra.mxu0 0.0
        %313 = vmatpush.msra.mxu0 0.0
        %314 = vmatpush.msra.mxu0 0.0
        %315 = vmatpush.msra.mxu0 0.0
        %316 = vmatpush.msra.mxu0 0.0
        %317 = vmatpush.msra.mxu0 0.0
        %318 = vmatpush.msra.mxu0 0.0
        %319 = vmatpush.msra.mxu0 0.0
        %320 = vmatpush.msra.mxu0 %v303
        %321 = vmatmul.f32.gmra.mxu0 %v275
        %v322 = vpop.f32.mrf.mxu0
        %v323 = vadd.f32 0.0, %v322
        %324 = vdwg.mxu0
        %325 = vxpose.xlu0.b32.start [1/16] %v299, 128
        %326 = vxpose.xlu0.b32.cont [2/16] 0.0, 128
        %327 = vxpose.xlu0.b32.cont [3/16] 0.0, 128
        %328 = vxpose.xlu0.b32.cont [4/16] 0.0, 128
        %329 = vxpose.xlu0.b32.cont [5/16] 0.0, 128
        %330 = vxpose.xlu0.b32.cont [6/16] 0.0, 128
        %331 = vxpose.xlu0.b32.cont [7/16] 0.0, 128
        %332 = vxpose.xlu0.b32.cont [8/16] 0.0, 128
        %333 = vxpose.xlu0.b32.cont [9/16] 0.0, 128
        %334 = vxpose.xlu0.b32.cont [10/16] 0.0, 128
        %335 = vxpose.xlu0.b32.cont [11/16] 0.0, 128
        %336 = vxpose.xlu0.b32.cont [12/16] 0.0, 128
        %337 = vxpose.xlu0.b32.cont [13/16] 0.0, 128
        %338 = vxpose.xlu0.b32.cont [14/16] 0.0, 128
        %339 = vxpose.xlu0.b32.cont [15/16] 0.0, 128
        %340 = vxpose.xlu0.b32.end [16/16] 0.0, 128
        %v341 = vpop.trf.xlu0
        %v342 = vpop.trf.xlu0
        %v343 = vpop.trf.xlu0
        %v344 = vpop.trf.xlu0
        %v345 = vpop.trf.xlu0
        %v346 = vpop.trf.xlu0
        %v347 = vpop.trf.xlu0
        %v348 = vpop.trf.xlu0
        %v349 = vpop.trf.xlu0
        %v350 = vpop.trf.xlu0
        %v351 = vpop.trf.xlu0
        %v352 = vpop.trf.xlu0
        %v353 = vpop.trf.xlu0
        %v354 = vpop.trf.xlu0
        %v355 = vpop.trf.xlu0
        %v356 = vpop.trf.xlu0
        %v358 = vrot.slane %v341, 1
        %vm360 = vcmask 40960
        %361 = vst.msk [vmem:[#allocation2] sm:$0x1] %vm360, %v341
        %362 = vst.msk [vmem:[#allocation2 + $0x1] sm:$0x1] %vm360, %v358
        %363 = vxpose.xlu0.b32.start [1/16] %v323, 128
        %364 = vxpose.xlu0.b32.cont [2/16] 0.0, 128
        %365 = vxpose.xlu0.b32.cont [3/16] 0.0, 128
        %366 = vxpose.xlu0.b32.cont [4/16] 0.0, 128
        %367 = vxpose.xlu0.b32.cont [5/16] 0.0, 128
        %368 = vxpose.xlu0.b32.cont [6/16] 0.0, 128
        %369 = vxpose.xlu0.b32.cont [7/16] 0.0, 128
        %370 = vxpose.xlu0.b32.cont [8/16] 0.0, 128
        %371 = vxpose.xlu0.b32.cont [9/16] 0.0, 128
        %372 = vxpose.xlu0.b32.cont [10/16] 0.0, 128
        %373 = vxpose.xlu0.b32.cont [11/16] 0.0, 128
        %374 = vxpose.xlu0.b32.cont [12/16] 0.0, 128
        %375 = vxpose.xlu0.b32.cont [13/16] 0.0, 128
        %376 = vxpose.xlu0.b32.cont [14/16] 0.0, 128
        %377 = vxpose.xlu0.b32.cont [15/16] 0.0, 128
        %378 = vxpose.xlu0.b32.end [16/16] 0.0, 128
        %v379 = vpop.trf.xlu0
        %v380 = vpop.trf.xlu0
        %v381 = vpop.trf.xlu0
        %v382 = vpop.trf.xlu0
        %v383 = vpop.trf.xlu0
        %v384 = vpop.trf.xlu0
        %v385 = vpop.trf.xlu0
        %v386 = vpop.trf.xlu0
        %v387 = vpop.trf.xlu0
        %v388 = vpop.trf.xlu0
        %v389 = vpop.trf.xlu0
        %v390 = vpop.trf.xlu0
        %v391 = vpop.trf.xlu0
        %v392 = vpop.trf.xlu0
        %v393 = vpop.trf.xlu0
        %v394 = vpop.trf.xlu0
        %v396 = vrot.slane %v379, 1
        %398 = vxpose.xlu0.b32.start [1/16] %v379, 128
        %399 = vxpose.xlu0.b32.cont [2/16] 0.0, 128
        %400 = vxpose.xlu0.b32.cont [3/16] 0.0, 128
        %401 = vxpose.xlu0.b32.cont [4/16] 0.0, 128
        %402 = vxpose.xlu0.b32.cont [5/16] 0.0, 128
        %403 = vxpose.xlu0.b32.cont [6/16] 0.0, 128
        %404 = vxpose.xlu0.b32.cont [7/16] 0.0, 128
        %405 = vxpose.xlu0.b32.cont [8/16] 0.0, 128
        %406 = vxpose.xlu0.b32.cont [9/16] 0.0, 128
        %407 = vxpose.xlu0.b32.cont [10/16] 0.0, 128
        %408 = vxpose.xlu0.b32.cont [11/16] 0.0, 128
        %409 = vxpose.xlu0.b32.cont [12/16] 0.0, 128
        %410 = vxpose.xlu0.b32.cont [13/16] 0.0, 128
        %411 = vxpose.xlu0.b32.cont [14/16] 0.0, 128
        %412 = vxpose.xlu0.b32.cont [15/16] 0.0, 128
        %413 = vxpose.xlu0.b32.end [16/16] 0.0, 128
        %v414 = vpop.trf.xlu0
        %v415 = vpop.trf.xlu0
        %v416 = vpop.trf.xlu0
        %v417 = vpop.trf.xlu0
        %v418 = vpop.trf.xlu0
        %v419 = vpop.trf.xlu0
        %v420 = vpop.trf.xlu0
        %v421 = vpop.trf.xlu0
        %v422 = vpop.trf.xlu0
        %v423 = vpop.trf.xlu0
        %v424 = vpop.trf.xlu0
        %v425 = vpop.trf.xlu0
        %v426 = vpop.trf.xlu0
        %v427 = vpop.trf.xlu0
        %v428 = vpop.trf.xlu0
        %v429 = vpop.trf.xlu0
        %430 = vxpose.xlu0.b32.start [1/16] %v396, 128
        %431 = vxpose.xlu0.b32.cont [2/16] 0.0, 128
        %432 = vxpose.xlu0.b32.cont [3/16] 0.0, 128
        %433 = vxpose.xlu0.b32.cont [4/16] 0.0, 128
        %434 = vxpose.xlu0.b32.cont [5/16] 0.0, 128
        %435 = vxpose.xlu0.b32.cont [6/16] 0.0, 128
        %436 = vxpose.xlu0.b32.cont [7/16] 0.0, 128
        %437 = vxpose.xlu0.b32.cont [8/16] 0.0, 128
        %438 = vxpose.xlu0.b32.cont [9/16] 0.0, 128
        %439 = vxpose.xlu0.b32.cont [10/16] 0.0, 128
        %440 = vxpose.xlu0.b32.cont [11/16] 0.0, 128
        %441 = vxpose.xlu0.b32.cont [12/16] 0.0, 128
        %442 = vxpose.xlu0.b32.cont [13/16] 0.0, 128
        %443 = vxpose.xlu0.b32.cont [14/16] 0.0, 128
        %444 = vxpose.xlu0.b32.cont [15/16] 0.0, 128
        %445 = vxpose.xlu0.b32.end [16/16] 0.0, 128
        %v446 = vpop.trf.xlu0
        %v447 = vpop.trf.xlu0
        %v448 = vpop.trf.xlu0
        %v449 = vpop.trf.xlu0
        %v450 = vpop.trf.xlu0
        %v451 = vpop.trf.xlu0
        %v452 = vpop.trf.xlu0
        %v453 = vpop.trf.xlu0
        %v454 = vpop.trf.xlu0
        %v455 = vpop.trf.xlu0
        %v456 = vpop.trf.xlu0
        %v457 = vpop.trf.xlu0
        %v458 = vpop.trf.xlu0
        %v459 = vpop.trf.xlu0
        %v460 = vpop.trf.xlu0
        %v461 = vpop.trf.xlu0
        %vm462 = vcmask 5120
        %463 = vst.msk [vmem:[#allocation3] sm:$0x3f] %vm462, %v414
        %464 = vst.msk [vmem:[#allocation3 + $0x8] sm:$0x3f] %vm462, %v446
      $region48: #{tpu_custom_call.1} parent=43 // pred_fallthru
        _
      %s465 = smul.u32 %s22, 6
      %s466 = scalar_lea.vmem %s259, %s465
      %v467 = vld [vmem:[%s466] sm:$0x3f]
      %v468 = vld [vmem:[%s1] sm:$0x7]
      %vm469 = vcmask 23552
      %v471 = vsel %vm469, %v467, 0
      %vm473 = vcmask 1042432
      %v475 = vsel %vm473, %v468, 0
      %477 = vmatpush.msra.mxu0 0.0
      %478 = vmatpush.msra.mxu0 0.0
      %479 = vmatpush.msra.mxu0 0.0
      %480 = vmatpush.msra.mxu0 0.0
      %481 = vmatpush.msra.mxu0 0.0
      %482 = vmatpush.msra.mxu0 0.0
      %483 = vmatpush.msra.mxu0 0.0
      %484 = vmatpush.msra.mxu0 0.0
      %485 = vmatpush.msra.mxu0 0.0
      %486 = vmatpush.msra.mxu0 0.0
      %487 = vmatpush.msra.mxu0 0.0
      %488 = vmatpush.msra.mxu0 0.0
      %489 = vmatpush.msra.mxu0 0.0
      %490 = vmatpush.msra.mxu0 0.0
      %491 = vmatpush.msra.mxu0 0.0
      %492 = vmatpush.msra.mxu0 %v475
      %493 = vmatmul.f32.gmra.mxu0 %v471
      %v494 = vpop.f32.mrf.mxu0
      %v495 = vadd.f32 0.0, %v494
      %496 = vdwg.mxu0
      %497 = vxpose.xlu0.b32.start [1/16] %v495, 128
      %498 = vxpose.xlu0.b32.cont [2/16] 0.0, 128
      %499 = vxpose.xlu0.b32.cont [3/16] 0.0, 128
      %500 = vxpose.xlu0.b32.cont [4/16] 0.0, 128
      %501 = vxpose.xlu0.b32.cont [5/16] 0.0, 128
      %502 = vxpose.xlu0.b32.cont [6/16] 0.0, 128
      %503 = vxpose.xlu0.b32.cont [7/16] 0.0, 128
      %504 = vxpose.xlu0.b32.cont [8/16] 0.0, 128
      %505 = vxpose.xlu0.b32.cont [9/16] 0.0, 128
      %506 = vxpose.xlu0.b32.cont [10/16] 0.0, 128
      %507 = vxpose.xlu0.b32.cont [11/16] 0.0, 128
      %508 = vxpose.xlu0.b32.cont [12/16] 0.0, 128
      %509 = vxpose.xlu0.b32.cont [13/16] 0.0, 128
      %510 = vxpose.xlu0.b32.cont [14/16] 0.0, 128
      %511 = vxpose.xlu0.b32.cont [15/16] 0.0, 128
      %512 = vxpose.xlu0.b32.end [16/16] 0.0, 128
      %v513 = vpop.trf.xlu0
      %v514 = vpop.trf.xlu0
      %v515 = vpop.trf.xlu0
      %v516 = vpop.trf.xlu0
      %v517 = vpop.trf.xlu0
      %v518 = vpop.trf.xlu0
      %v519 = vpop.trf.xlu0
      %v520 = vpop.trf.xlu0
      %v521 = vpop.trf.xlu0
      %v522 = vpop.trf.xlu0
      %v523 = vpop.trf.xlu0
      %v524 = vpop.trf.xlu0
      %v525 = vpop.trf.xlu0
      %v526 = vpop.trf.xlu0
      %v527 = vpop.trf.xlu0
      %v528 = vpop.trf.xlu0
      %v530 = vrot.slane %v513, 1
      %532 = vxpose.xlu0.b32.start [1/16] %v513, 128
      %533 = vxpose.xlu0.b32.cont [2/16] 0.0, 128
      %534 = vxpose.xlu0.b32.cont [3/16] 0.0, 128
      %535 = vxpose.xlu0.b32.cont [4/16] 0.0, 128
      %536 = vxpose.xlu0.b32.cont [5/16] 0.0, 128
      %537 = vxpose.xlu0.b32.cont [6/16] 0.0, 128
      %538 = vxpose.xlu0.b32.cont [7/16] 0.0, 128
      %539 = vxpose.xlu0.b32.cont [8/16] 0.0, 128
      %540 = vxpose.xlu0.b32.cont [9/16] 0.0, 128
      %541 = vxpose.xlu0.b32.cont [10/16] 0.0, 128
      %542 = vxpose.xlu0.b32.cont [11/16] 0.0, 128
      %543 = vxpose.xlu0.b32.cont [12/16] 0.0, 128
      %544 = vxpose.xlu0.b32.cont [13/16] 0.0, 128
      %545 = vxpose.xlu0.b32.cont [14/16] 0.0, 128
      %546 = vxpose.xlu0.b32.cont [15/16] 0.0, 128
      %547 = vxpose.xlu0.b32.end [16/16] 0.0, 128
      %v548 = vpop.trf.xlu0
      %v549 = vpop.trf.xlu0
      %v550 = vpop.trf.xlu0
      %v551 = vpop.trf.xlu0
      %v552 = vpop.trf.xlu0
      %v553 = vpop.trf.xlu0
      %v554 = vpop.trf.xlu0
      %v555 = vpop.trf.xlu0
      %v556 = vpop.trf.xlu0
      %v557 = vpop.trf.xlu0
      %v558 = vpop.trf.xlu0
      %v559 = vpop.trf.xlu0
      %v560 = vpop.trf.xlu0
      %v561 = vpop.trf.xlu0
      %v562 = vpop.trf.xlu0
      %v563 = vpop.trf.xlu0
      %564 = vxpose.xlu0.b32.start [1/16] %v530, 128
      %565 = vxpose.xlu0.b32.cont [2/16] 0.0, 128
      %566 = vxpose.xlu0.b32.cont [3/16] 0.0, 128
      %567 = vxpose.xlu0.b32.cont [4/16] 0.0, 128
      %568 = vxpose.xlu0.b32.cont [5/16] 0.0, 128
      %569 = vxpose.xlu0.b32.cont [6/16] 0.0, 128
      %570 = vxpose.xlu0.b32.cont [7/16] 0.0, 128
      %571 = vxpose.xlu0.b32.cont [8/16] 0.0, 128
      %572 = vxpose.xlu0.b32.cont [9/16] 0.0, 128
      %573 = vxpose.xlu0.b32.cont [10/16] 0.0, 128
      %574 = vxpose.xlu0.b32.cont [11/16] 0.0, 128
      %575 = vxpose.xlu0.b32.cont [12/16] 0.0, 128
      %576 = vxpose.xlu0.b32.cont [13/16] 0.0, 128
      %577 = vxpose.xlu0.b32.cont [14/16] 0.0, 128
      %578 = vxpose.xlu0.b32.cont [15/16] 0.0, 128
      %579 = vxpose.xlu0.b32.end [16/16] 0.0, 128
      %v580 = vpop.trf.xlu0
      %v581 = vpop.trf.xlu0
      %v582 = vpop.trf.xlu0
      %v583 = vpop.trf.xlu0
      %v584 = vpop.trf.xlu0
      %v585 = vpop.trf.xlu0
      %v586 = vpop.trf.xlu0
      %v587 = vpop.trf.xlu0
      %v588 = vpop.trf.xlu0
      %v589 = vpop.trf.xlu0
      %v590 = vpop.trf.xlu0
      %v591 = vpop.trf.xlu0
      %v592 = vpop.trf.xlu0
      %v593 = vpop.trf.xlu0
      %v594 = vpop.trf.xlu0
      %v595 = vpop.trf.xlu0
      %vm596 = vcmask 5120
      %597 = vst.msk [vmem:[#allocation4] sm:$0x3f] %vm596, -1e+30
      %598 = vst.msk [vmem:[#allocation4 + $0x8] sm:$0x3f] %vm596, -1e+30
      %599 = vst.msk [vmem:[#allocation5] sm:$0x3f] %vm596, 0.0
      %600 = vst.msk [vmem:[#allocation5 + $0x8] sm:$0x3f] %vm596, 0.0
      %601 = vst.msk [vmem:[#allocation6] sm:$0x3f] %vm596, 0.0
      %602 = vst.msk [vmem:[#allocation6 + $0x8] sm:$0x3f] %vm596, 0.0
      %v603 = vld [vmem:[#allocation2] sm:$0x1]
      %v604 = vld [vmem:[#allocation2 + $0x1] sm:$0x1]
      %v605 = vld [vmem:[#allocation3] sm:$0x3f]
      %v606 = vld [vmem:[#allocation3 + $0x8] sm:$0x3f]
      %vm607 = vcmask 7168
      %v609 = vsel %vm607, %v548, 0
      %vm611 = vcmask 1040384
      %v613 = vsel %vm611, %v603, 0
      %615 = vmatpush.msra.mxu0 0.0
      %616 = vmatpush.msra.mxu0 0.0
      %617 = vmatpush.msra.mxu0 0.0
      %618 = vmatpush.msra.mxu0 0.0
      %619 = vmatpush.msra.mxu0 0.0
      %620 = vmatpush.msra.mxu0 0.0
      %621 = vmatpush.msra.mxu0 0.0
      %622 = vmatpush.msra.mxu0 0.0
      %623 = vmatpush.msra.mxu0 0.0
      %624 = vmatpush.msra.mxu0 0.0
      %625 = vmatpush.msra.mxu0 0.0
      %626 = vmatpush.msra.mxu0 0.0
      %627 = vmatpush.msra.mxu0 0.0
      %628 = vmatpush.msra.mxu0 0.0
      %629 = vmatpush.msra.mxu0 0.0
      %630 = vmatpush.msra.mxu0 %v613
      %631 = vmatmul.f32.gmra.mxu0 %v609
      %v632 = vpop.f32.mrf.mxu0
      %v633 = vadd.f32 0.0, %v632
      %634 = vdwg.mxu0
      %v636 = vsel %vm607, %v580, 0
      %v639 = vsel %vm611, %v604, 0
      %641 = vmatpush.msra.mxu0 0.0
      %642 = vmatpush.msra.mxu0 0.0
      %643 = vmatpush.msra.mxu0 0.0
      %644 = vmatpush.msra.mxu0 0.0
      %645 = vmatpush.msra.mxu0 0.0
      %646 = vmatpush.msra.mxu0 0.0
      %647 = vmatpush.msra.mxu0 0.0
      %648 = vmatpush.msra.mxu0 0.0
      %649 = vmatpush.msra.mxu0 0.0
      %650 = vmatpush.msra.mxu0 0.0
      %651 = vmatpush.msra.mxu0 0.0
      %652 = vmatpush.msra.mxu0 0.0
      %653 = vmatpush.msra.mxu0 0.0
      %654 = vmatpush.msra.mxu0 0.0
      %655 = vmatpush.msra.mxu0 0.0
      %656 = vmatpush.msra.mxu0 %v639
      %657 = vmatmul.f32.gmra.mxu0 %v636
      %v658 = vpop.f32.mrf.mxu0
      %v659 = vadd.f32 0.0, %v658
      %660 = vdwg.mxu0
      %v661 = vlaneseq
      %v662 = vshrl.u32 %v661, 7
      %v663 = vstv %s465
      %v664 = vadd.s32 %v663, %v662
      %v665 = vlaneseq
      %v666 = vand.u32 %v665, 127
      %vm667 = vcmp.gt.s32.totalorder %v666, %v664
      %v668 = vsel %vm667, 1, 0
      %vm669 = vcmp.eq.s32.totalorder %v668, 1
      %v670 = vsel %vm669, -1e+30, %v633
      %v671 = vsel %vm669, -1e+30, %v659
      %v672 = vld [vmem:[#allocation4] sm:$0x3f]
      %v673 = vld [vmem:[#allocation4 + $0x8] sm:$0x3f]
      %vm674 = vcmask 46080
      %v675 = vsel %vm674, %v670, -inf
      %676 = vmax.xlane.f32.xlu0 %v675
      %v677 = vpop.xlane.xlu0 %676
      %v678 = vsel %vm674, %v671, -inf
      %679 = vmax.xlane.f32.xlu0 %v678
      %v680 = vpop.xlane.xlu0 %679
      %v681 = vmax.f32 %v672, %v677
      %v682 = vmax.f32 %v673, %v680
      %v683 = vsub.f32 %v672, %v681
      %v684 = vsub.f32 %v673, %v682
      %v685 = vmul.f32 %v683, 1.442695
      %v686 = vpow.pop %v685
      %v687 = vmul.f32 %v684, 1.442695
      %v688 = vpow.pop %v687
      %690 = vset.pattern.permute.xlu0 0
      %691 = vperm.xlu0 %690, %v681
      %v692 = vpop.permute.xlu0 %691
      %695 = vset.pattern.permute.xlu0 0
      %696 = vperm.xlu0 %695, %v682
      %v697 = vpop.permute.xlu0 %696
      %v699 = vsub.f32 %v670, %v692
      %v700 = vsub.f32 %v671, %v697
      %v701 = vmul.f32 %v699, 1.442695
      %v702 = vpow.pop %v701
      %v703 = vmul.f32 %v700, 1.442695
      %v704 = vpow.pop %v703
      %v705 = vld [vmem:[#allocation5] sm:$0x3f]
      %v706 = vld [vmem:[#allocation5 + $0x8] sm:$0x3f]
      %v707 = vmul.f32 %v686, %v705
      %v708 = vmul.f32 %v688, %v706
      %v709 = vsel %vm674, %v702, 0.0
      %710 = vadd.xlane.f32.xlu0 %v709
      %v711 = vpop.xlane.xlu0 %710
      %v712 = vsel %vm674, %v704, 0.0
      %713 = vadd.xlane.f32.xlu0 %v712
      %v714 = vpop.xlane.xlu0 %713
      %v715 = vadd.f32 %v707, %v711
      %v716 = vadd.f32 %v708, %v714
      %717 = vst.msk [vmem:[#allocation5] sm:$0x3f] %vm596, %v715
      %718 = vst.msk [vmem:[#allocation5 + $0x8] sm:$0x3f] %vm596, %v716
      %v719 = vld [vmem:[#allocation6] sm:$0x3f]
      %v720 = vld [vmem:[#allocation6 + $0x8] sm:$0x3f]
      %v721 = vmul.f32 %v686, %v719
      %v722 = vmul.f32 %v688, %v720
      %vm723 = vcmask 48128
      %v725 = vsel %vm723, %v702, 0
      %vm727 = vcmask 1045504
      %v729 = vsel %vm727, %v605, 0
      %731 = vmatpush.msra.mxu0 0.0
      %732 = vmatpush.msra.mxu0 0.0
      %733 = vmatpush.msra.mxu0 0.0
      %734 = vmatpush.msra.mxu0 0.0
      %735 = vmatpush.msra.mxu0 0.0
      %736 = vmatpush.msra.mxu0 0.0
      %737 = vmatpush.msra.mxu0 0.0
      %738 = vmatpush.msra.mxu0 0.0
      %739 = vmatpush.msra.mxu0 0.0
      %740 = vmatpush.msra.mxu0 0.0
      %741 = vmatpush.msra.mxu0 0.0
      %742 = vmatpush.msra.mxu0 0.0
      %743 = vmatpush.msra.mxu0 0.0
      %744 = vmatpush.msra.mxu0 0.0
      %745 = vmatpush.msra.mxu0 0.0
      %746 = vmatpush.msra.mxu0 %v729
      %747 = vmatmul.f32.gmra.mxu0 %v725
      %v748 = vpop.f32.mrf.mxu0
      %v749 = vadd.f32 0.0, %v748
      %750 = vdwg.mxu0
      %v752 = vsel %vm723, %v704, 0
      %v755 = vsel %vm727, %v606, 0
      %757 = vmatpush.msra.mxu0 0.0
      %758 = vmatpush.msra.mxu0 0.0
      %759 = vmatpush.msra.mxu0 0.0
      %760 = vmatpush.msra.mxu0 0.0
      %761 = vmatpush.msra.mxu0 0.0
      %762 = vmatpush.msra.mxu0 0.0
      %763 = vmatpush.msra.mxu0 0.0
      %764 = vmatpush.msra.mxu0 0.0
      %765 = vmatpush.msra.mxu0 0.0
      %766 = vmatpush.msra.mxu0 0.0
      %767 = vmatpush.msra.mxu0 0.0
      %768 = vmatpush.msra.mxu0 0.0
      %769 = vmatpush.msra.mxu0 0.0
      %770 = vmatpush.msra.mxu0 0.0
      %771 = vmatpush.msra.mxu0 0.0
      %772 = vmatpush.msra.mxu0 %v755
      %773 = vmatmul.f32.gmra.mxu0 %v752
      %v774 = vpop.f32.mrf.mxu0
      %v775 = vadd.f32 0.0, %v774
      %776 = vdwg.mxu0
      %v777 = vadd.f32 %v721, %v749
      %v778 = vadd.f32 %v722, %v775
      %779 = vst.msk [vmem:[#allocation6] sm:$0x3f] %vm596, %v777
      %780 = vst.msk [vmem:[#allocation6 + $0x8] sm:$0x3f] %vm596, %v778
      %781 = vst.msk [vmem:[#allocation4] sm:$0x3f] %vm596, %v681
      %782 = vst.msk [vmem:[#allocation4 + $0x8] sm:$0x3f] %vm596, %v682
      %v783 = vld [vmem:[#allocation6] sm:$0x3f]
      %v784 = vld [vmem:[#allocation6 + $0x8] sm:$0x3f]
      %v785 = vld [vmem:[#allocation5] sm:$0x3f]
      %v786 = vld [vmem:[#allocation5 + $0x8] sm:$0x3f]
      %v787 = vrcp.pop %v785
      %v788 = vrcp.pop %v786
      %v789 = vmul.f32 %v783, %v787
      %v790 = vmul.f32 %v784, %v788
      %v791 = vld [vmem:[%s4] sm:$0x1]
      %v792 = vld [vmem:[%s4 + $0x1] sm:$0x1]
      %v794 = vsel %vm607, %v789, 0
      %v797 = vsel %vm611, %v791, 0
      %799 = vmatpush.msra.mxu0 0.0
      %800 = vmatpush.msra.mxu0 0.0
      %801 = vmatpush.msra.mxu0 0.0
      %802 = vmatpush.msra.mxu0 0.0
      %803 = vmatpush.msra.mxu0 0.0
      %804 = vmatpush.msra.mxu0 0.0
      %805 = vmatpush.msra.mxu0 0.0
      %806 = vmatpush.msra.mxu0 0.0
      %807 = vmatpush.msra.mxu0 0.0
      %808 = vmatpush.msra.mxu0 0.0
      %809 = vmatpush.msra.mxu0 0.0
      %810 = vmatpush.msra.mxu0 0.0
      %811 = vmatpush.msra.mxu0 0.0
      %812 = vmatpush.msra.mxu0 0.0
      %813 = vmatpush.msra.mxu0 0.0
      %814 = vmatpush.msra.mxu0 %v797
      %815 = vmatmul.f32.gmra.mxu0 %v794
      %v816 = vpop.f32.mrf.mxu0
      %v817 = vadd.f32 0.0, %v816
      %818 = vdwg.mxu0
      %v820 = vsel %vm607, %v790, 0
      %v823 = vsel %vm611, %v792, 0
      %825 = vmatpush.msra.mxu0 0.0
      %826 = vmatpush.msra.mxu0 0.0
      %827 = vmatpush.msra.mxu0 0.0
      %828 = vmatpush.msra.mxu0 0.0
      %829 = vmatpush.msra.mxu0 0.0
      %830 = vmatpush.msra.mxu0 0.0
      %831 = vmatpush.msra.mxu0 0.0
      %832 = vmatpush.msra.mxu0 0.0
      %833 = vmatpush.msra.mxu0 0.0
      %834 = vmatpush.msra.mxu0 0.0
      %835 = vmatpush.msra.mxu0 0.0
      %836 = vmatpush.msra.mxu0 0.0
      %837 = vmatpush.msra.mxu0 0.0
      %838 = vmatpush.msra.mxu0 0.0
      %839 = vmatpush.msra.mxu0 0.0
      %840 = vmatpush.msra.mxu0 %v823
      %841 = vmatmul.f32.gmra.mxu0 %v820
      %v842 = vpop.f32.mrf.mxu0
      %v843 = vadd.f32 0.0, %v842
      %844 = vdwg.mxu0
      %vm845 = vcmask 13312
      %v846 = vsel %vm845, %v817, 0.0
      %v847 = vsel %vm845, %v843, 0.0
      %v848 = vadd.f32 %v846, %v847
      %v849 = vld [vmem:[%s5] sm:$0x1]
      %v851 = vperm.slane %v849, 0
      %v853 = vadd.f32 %v848, %v851
      %854 = vst.msk [vmem:[%s266] sm:$0x3f] %vm845, %v853
      %p855 = scmp.lt.s32.totalorder %s21, 1
      %s856 = scalar_select %p855, %s21, 1
      %p857 = scmp.lt.s32.totalorder %s22, 0
      %s858 = scalar_select %p857, %s22, 0
      %s859 = sadd.s32 %s858, %s856
      %s860 = smul.addr %s859, 8
      %s861 = scalar_lea.vmem %s6, %s860
      // Predicated region
      $region49: #{tpu_custom_call.1} parent=43 // pred_check
        %p862 = pneg %p180
      $region50: #{tpu_custom_call.1} parent=43 // pred_check_branch
        %864 = sbr.rel (%p862) target = $region52
      $region51: #{tpu_custom_call.1} parent=43 // pred_region
        _
      $region52: #{tpu_custom_call.1} parent=43 // pred_fallthru
        _
    $region44: #{tpu_custom_call.1} parent=5 // pred_fallthru
      _
    %p865 = scmp.le.s32.totalorder 2, %s12
    // Predicated region
    $region53: #{tpu_custom_call.1} parent=5 // pred_check
      %p866 = pneg %p865
    $region54: #{tpu_custom_call.1} parent=5 // pred_check_branch
      %868 = sbr.rel (%p866) target = $region56
    $region55: #{tpu_custom_call.1} parent=5 // pred_region
      %s869 = ssub.s32 %s12, 2
      // Predicated region
      $region57: #{tpu_custom_call.1} parent=55 // pred_check
        %p870 = pneg %p186
      $region58: #{tpu_custom_call.1} parent=55 // pred_check_branch
        %872 = sbr.rel (%p870) target = $region60
      $region59: #{tpu_custom_call.1} parent=55 // pred_region
        %p873 = scmp.lt.s32.totalorder %s23, 1
        %s874 = scalar_select %p873, %s23, 1
        %p875 = scmp.lt.s32.totalorder %s24, 0
        %s876 = scalar_select %p875, %s24, 0
        %s877 = sadd.s32 %s876, %s874
        %s878 = smul.addr %s877, 8
        %s879 = scalar_lea.vmem %s6, %s878
      $region60: #{tpu_custom_call.1} parent=55 // pred_fallthru
        _
    $region56: #{tpu_custom_call.1} parent=5 // pred_fallthru
      _
  $region6: #{tpu_custom_call.1} parent=0 // loop_footer
    %s16 = sadd.s32 1, %s12
  $region7: #{tpu_custom_call.1} parent=0 // loop_footer_branch
    %11 = sbr.rel target = $region3
  $region8: #{tpu_custom_call.1} parent=0 // loop_exit
    _

</llo_original>
